<compile_context>
chip_gen: v7x
topology: tpu7x:2x2x1
jax: 0.10.0
libtpu: 0.0.40
codegen_flags: <defaults>
</compile_context>

<pallas_src>
import functools

import jax
import jax.numpy as jnp
from jax.experimental import pallas as pl
from jax.experimental.pallas import tpu as pltpu


def _round_up(x, m):
    return ((x + m - 1) // m) * m


def _lstm_kernel(x_ref, wih_ref, whh_ref, b_ref, wfc_ref, bfc_ref, o_ref, h_sc, c_sc):
    """One (batch_tile, time_step) grid point of the LSTM + fused FC.

    x_ref:  (TB, E)      bf16   input at time t for this batch tile
    wih_ref:(E, 4H)      bf16   input-to-hidden weights (gate order i,f,g,o)
    whh_ref:(H, 4H)      bf16   hidden-to-hidden weights
    b_ref:  (1, 4H)      f32    combined bias (b_ih + b_hh)
    wfc_ref:(H, Fpad)    bf16   fc weights, zero-padded to 128 lanes
    bfc_ref:(1, Fpad)    f32    fc bias, zero-padded
    o_ref:  (TB, Fpad)   f32    output at time t for this batch tile
    h_sc/c_sc: (TB, H)   f32    carried hidden / cell state (VMEM scratch)
    """
    t = pl.program_id(1)

    @pl.when(t == 0)
    def _():
        h_sc[...] = jnp.zeros_like(h_sc)
        c_sc[...] = jnp.zeros_like(c_sc)

    H = h_sc.shape[-1]

    x_t = x_ref[...]                                   # (TB, E) bf16
    h_prev = h_sc[...]                                 # (TB, H) f32

    # Gate pre-activations, f32 accumulation on the MXU.
    gates = jnp.dot(x_t, wih_ref[...], preferred_element_type=jnp.float32)
    gates = gates + jnp.dot(h_prev.astype(whh_ref.dtype), whh_ref[...],
                            preferred_element_type=jnp.float32)
    gates = gates + b_ref[...]                         # (TB, 4H) f32

    # PyTorch gate order: i, f, g, o (lane-aligned 128-wide slices).
    i_g = jax.nn.sigmoid(gates[:, 0 * H:1 * H])
    f_g = jax.nn.sigmoid(gates[:, 1 * H:2 * H])
    g_g = jnp.tanh(gates[:, 2 * H:3 * H])
    o_g = jax.nn.sigmoid(gates[:, 3 * H:4 * H])

    c_new = f_g * c_sc[...] + i_g * g_g
    h_new = o_g * jnp.tanh(c_new)

    c_sc[...] = c_new
    h_sc[...] = h_new

    # Fused fc: h_t @ W_fc + b_fc, lane-dense (padded to 128) output store.
    out = jnp.dot(h_new.astype(wfc_ref.dtype), wfc_ref[...],
                  preferred_element_type=jnp.float32)
    o_ref[...] = (out + bfc_ref[...]).astype(o_ref.dtype)


@functools.partial(jax.jit, static_argnames=("batch_tile",))
def lstm_forward(x, params, *, batch_tile=128):
    """x: [B, S, E] f32.  Returns [B, S, 64] f32 (matches the PyTorch module)."""
    B, S, E = x.shape
    H = params["w_hh"].shape[0]          # 128
    F_out = params["w_fc"].shape[1]      # 64
    F_pad = _round_up(F_out, 128)        # lane-dense output slab

    TB = min(batch_tile, _round_up(B, 8))
    B_pad = _round_up(B, TB)

    # Time-major layout (mirrors x.transpose(0,1) in the PyTorch forward),
    # pad batch to a multiple of the batch tile.
    x_tm = jnp.transpose(x, (1, 0, 2))                                  # [S, B, E]
    if B_pad != B:
        x_tm = jnp.pad(x_tm, ((0, 0), (0, B_pad - B), (0, 0)))
    x_bf = x_tm.astype(jnp.bfloat16)

    w_ih = params["w_ih"].astype(jnp.bfloat16)                          # [E, 4H]
    w_hh = params["w_hh"].astype(jnp.bfloat16)                          # [H, 4H]
    b = params["b"].astype(jnp.float32)                                 # [1, 4H]
    w_fc = jnp.zeros((H, F_pad), jnp.bfloat16).at[:, :F_out].set(
        params["w_fc"].astype(jnp.bfloat16))                            # [H, Fpad]
    b_fc = jnp.zeros((1, F_pad), jnp.float32).at[:, :F_out].set(
        params["b_fc"].astype(jnp.float32))                             # [1, Fpad]

    grid = (B_pad // TB, S)

    def full(a):
        return pl.BlockSpec(a.shape, lambda b_, t_: (0,) * a.ndim)

    cost = pl.CostEstimate(
        flops=2 * B_pad * S * (E * 4 * H + H * 4 * H + H * F_pad),
        transcendentals=B_pad * S * 5 * H,
        bytes_accessed=(x_bf.size * 2 + w_ih.size * 2 + w_hh.size * 2 + b.size * 4
                        + w_fc.size * 2 + b_fc.size * 4 + B_pad * S * F_pad * 4),
    )

    out = pl.pallas_call(
        _lstm_kernel,
        out_shape=jax.ShapeDtypeStruct((S, B_pad, F_pad), jnp.float32),
        grid_spec=pltpu.PrefetchScalarGridSpec(
            num_scalar_prefetch=0,
            grid=grid,
            in_specs=[
                # x: one time step, one batch tile (leading seq dim squeezed).
                pl.BlockSpec((None, TB, E), lambda b_, t_: (t_, b_, 0)),
                full(w_ih), full(w_hh), full(b), full(w_fc), full(b_fc),
            ],
            out_specs=pl.BlockSpec((None, TB, F_pad), lambda b_, t_: (t_, b_, 0)),
            scratch_shapes=[
                pltpu.VMEM((TB, H), jnp.float32),   # h carry
                pltpu.VMEM((TB, H), jnp.float32),   # c carry
            ],
        ),
        compiler_params=pltpu.CompilerParams(
            dimension_semantics=("parallel", "arbitrary"),
        ),
        cost_estimate=cost,
    )(x_bf, w_ih, w_hh, b, w_fc, b_fc)

    # Back to batch-major; drop batch padding and fc lane padding.
    out = jnp.transpose(out, (1, 0, 2))[:B, :, :F_out]
    return out


def init_params(key, input_size=768, hidden_size=128, fc_out=64):
    """Matches PyTorch defaults: LSTM params ~ U(-1/sqrt(H), 1/sqrt(H)),
    Linear ~ U(-1/sqrt(fan_in), 1/sqrt(fan_in)).  Gate order [i, f, g, o]."""
    ks = jax.random.split(key, 6)
    kh = 1.0 / float(jnp.sqrt(hidden_size))
    w_ih = jax.random.uniform(ks[0], (input_size, 4 * hidden_size), jnp.float32, -kh, kh)
    w_hh = jax.random.uniform(ks[1], (hidden_size, 4 * hidden_size), jnp.float32, -kh, kh)
    b_ih = jax.random.uniform(ks[2], (1, 4 * hidden_size), jnp.float32, -kh, kh)
    b_hh = jax.random.uniform(ks[3], (1, 4 * hidden_size), jnp.float32, -kh, kh)
    kf = 1.0 / float(jnp.sqrt(hidden_size))
    w_fc = jax.random.uniform(ks[4], (hidden_size, fc_out), jnp.float32, -kf, kf)
    b_fc = jax.random.uniform(ks[5], (1, fc_out), jnp.float32, -kf, kf)
    return dict(w_ih=w_ih, w_hh=w_hh, b=b_ih + b_hh, w_fc=w_fc, b_fc=b_fc)


def _reference(x, p):
    """Pure-JAX f32 reference for the LSTM + fc forward."""
    B, S, E = x.shape
    H = p["w_hh"].shape[0]

    def step(carry, x_t):
        h, c = carry
        gates = x_t @ p["w_ih"] + h @ p["w_hh"] + p["b"]
        i_g, f_g, g_g, o_g = jnp.split(gates, 4, axis=-1)
        i_g = jax.nn.sigmoid(i_g)
        f_g = jax.nn.sigmoid(f_g)
        g_g = jnp.tanh(g_g)
        o_g = jax.nn.sigmoid(o_g)
        c = f_g * c + i_g * g_g
        h = o_g * jnp.tanh(c)
        return (h, c), h

    x_tm = jnp.transpose(x, (1, 0, 2))                       # [S, B, E]
    init = (jnp.zeros((B, H), jnp.float32), jnp.zeros((B, H), jnp.float32))
    _, hs = jax.lax.scan(step, init, x_tm)                   # [S, B, H]
    hs = jnp.transpose(hs, (1, 0, 2))                        # [B, S, H]
    return hs @ p["w_fc"] + p["b_fc"]


if __name__ == "__main__":
    # Small shapes consistent with the module: emb=768, hidden=128, fc_out=64.
    batch, seq, emb, hidden, fc_out = 8, 10, 768, 128, 64

    key = jax.random.PRNGKey(0)
    kx, kp = jax.random.split(key)
    x = jax.random.normal(kx, (batch, seq, emb), jnp.float32)
    params = init_params(kp, input_size=emb, hidden_size=hidden, fc_out=fc_out)

    out = lstm_forward(x, params)
    out = jax.block_until_ready(out)

    ref = _reference(x, params)
    assert out.shape == (batch, seq, fc_out), out.shape
    # bf16 MXU operands vs f32 reference -> loosened tolerance.
    assert jnp.allclose(out, ref, atol=5e-2, rtol=5e-2), float(jnp.max(jnp.abs(out - ref)))

    print("KERNEL_OK")
</pallas_src>

<mosaic_0001>
module attributes {stable_mosaic.version = 11 : i64} {
  func.func @_lstm_kernel(%arg0: i32, %arg1: i32, %arg2: memref<1x8x768xbf16, #tpu.memory_space<vmem>>, %arg3: memref<768x512xbf16, #tpu.memory_space<vmem>>, %arg4: memref<128x512xbf16, #tpu.memory_space<vmem>>, %arg5: memref<1x512xf32, #tpu.memory_space<vmem>>, %arg6: memref<128x128xbf16, #tpu.memory_space<vmem>>, %arg7: memref<1x128xf32, #tpu.memory_space<vmem>>, %arg8: memref<1x8x128xf32, #tpu.memory_space<vmem>>, %arg9: memref<8x128xf32, #tpu.memory_space<vmem>>, %arg10: memref<8x128xf32, #tpu.memory_space<vmem>>) attributes {dimension_semantics = [#tpu.dimension_semantics<parallel>, #tpu.dimension_semantics<arbitrary>], iteration_bounds = array<i64: 1, 10>, scalar_prefetch = 0 : i64, scratch_operands = 2 : i64, tpu.core_type = #tpu.core_type<tc>, window_params = [{transform_indices = @transform_0, window_bounds = array<i64: 1, 8, 768>}, {pipeline_mode = #tpu.pipeline_mode<synchronous>, transform_indices = @transform_1, window_bounds = array<i64: 768, 512>}, {pipeline_mode = #tpu.pipeline_mode<synchronous>, transform_indices = @transform_2, window_bounds = array<i64: 128, 512>}, {pipeline_mode = #tpu.pipeline_mode<synchronous>, transform_indices = @transform_3, window_bounds = array<i64: 1, 512>}, {pipeline_mode = #tpu.pipeline_mode<synchronous>, transform_indices = @transform_4, window_bounds = array<i64: 128, 128>}, {pipeline_mode = #tpu.pipeline_mode<synchronous>, transform_indices = @transform_5, window_bounds = array<i64: 1, 128>}, {transform_indices = @transform_6, window_bounds = array<i64: 1, 8, 128>}]} {
    %c0_i32 = arith.constant 0 : i32
    %0 = arith.cmpi eq, %arg1, %c0_i32 : i32
    %1 = arith.extui %0 : i1 to i32
    %c0_i32_0 = arith.constant 0 : i32
    %2 = arith.cmpi ne, %1, %c0_i32_0 : i32
    scf.if %2 {
      %cst_29 = arith.constant 0.000000e+00 : f32
      %52 = vector.broadcast %cst_29 : f32 to vector<8x128xf32>
      %c0_30 = arith.constant 0 : index
      %c0_31 = arith.constant 0 : index
      %53 = vector.load %arg9[%c0_30, %c0_31] : memref<8x128xf32, #tpu.memory_space<vmem>>, vector<8x128xf32>
      tpu.vector_store %arg9[%c0_30, %c0_31], %52 {strides = array<i32>} : memref<8x128xf32, #tpu.memory_space<vmem>>, vector<8x128xf32>,
      %cst_32 = arith.constant 0.000000e+00 : f32
      %54 = vector.broadcast %cst_32 : f32 to vector<8x128xf32>
      %c0_33 = arith.constant 0 : index
      %c0_34 = arith.constant 0 : index
      %55 = vector.load %arg10[%c0_33, %c0_34] : memref<8x128xf32, #tpu.memory_space<vmem>>, vector<8x128xf32>
      tpu.vector_store %arg10[%c0_33, %c0_34], %54 {strides = array<i32>} : memref<8x128xf32, #tpu.memory_space<vmem>>, vector<8x128xf32>,
    } else {
    }
    %c0 = arith.constant 0 : index
    %c0_1 = arith.constant 0 : index
    %c0_2 = arith.constant 0 : index
    %3 = vector.load %arg2[%c0, %c0_1, %c0_2] : memref<1x8x768xbf16, #tpu.memory_space<vmem>>, vector<1x8x768xbf16>
    %4 = vector.shape_cast %3 : vector<1x8x768xbf16> to vector<8x768xbf16>
    %c0_3 = arith.constant 0 : index
    %c0_4 = arith.constant 0 : index
    %5 = vector.load %arg9[%c0_3, %c0_4] : memref<8x128xf32, #tpu.memory_space<vmem>>, vector<8x128xf32>
    %c0_5 = arith.constant 0 : index
    %c0_6 = arith.constant 0 : index
    %6 = vector.load %arg3[%c0_5, %c0_6] : memref<768x512xbf16, #tpu.memory_space<vmem>>, vector<768x512xbf16>
    %cst = arith.constant dense<0.000000e+00> : vector<8x512xf32>
    %7 = tpu.matmul %4, %6, %cst {dimension_numbers = #tpu.dot_dimension_numbers<[1], [0], [0], [1], [0, 0, 1, 1], [], []>} : vector<8x768xbf16>, vector<768x512xbf16>, vector<8x512xf32> -> vector<8x512xf32>
    %8 = arith.truncf %5 : vector<8x128xf32> to vector<8x128xbf16>
    %c0_7 = arith.constant 0 : index
    %c0_8 = arith.constant 0 : index
    %9 = vector.load %arg4[%c0_7, %c0_8] : memref<128x512xbf16, #tpu.memory_space<vmem>>, vector<128x512xbf16>
    %cst_9 = arith.constant dense<0.000000e+00> : vector<8x512xf32>
    %10 = tpu.matmul %8, %9, %cst_9 {dimension_numbers = #tpu.dot_dimension_numbers<[1], [0], [0], [1], [0, 0, 1, 1], [], []>} : vector<8x128xbf16>, vector<128x512xbf16>, vector<8x512xf32> -> vector<8x512xf32>
    %11 = arith.addf %7, %10 : vector<8x512xf32>
    %c0_10 = arith.constant 0 : index
    %c0_11 = arith.constant 0 : index
    %12 = vector.load %arg5[%c0_10, %c0_11] : memref<1x512xf32, #tpu.memory_space<vmem>>, vector<1x512xf32>
    %13 = vector.broadcast %12 : vector<1x512xf32> to vector<8x512xf32>
    %14 = arith.addf %11, %13 : vector<8x512xf32>
    %15 = vector.extract_strided_slice %14 {offsets = [0, 0], sizes = [8, 128], strides = [1, 1]} : vector<8x512xf32> to vector<8x128xf32>
    %16 = arith.negf %15 : vector<8x128xf32>
    %17 = math.exp %16 : vector<8x128xf32>
    %cst_12 = arith.constant 1.000000e+00 : f32
    %18 = vector.broadcast %cst_12 : f32 to vector<8x128xf32>
    %19 = arith.addf %18, %17 : vector<8x128xf32>
    %20 = arith.divf %18, %19 : vector<8x128xf32>
    %21 = vector.extract_strided_slice %14 {offsets = [0, 128], sizes = [8, 128], strides = [1, 1]} : vector<8x512xf32> to vector<8x128xf32>
    %22 = arith.negf %21 : vector<8x128xf32>
    %23 = math.exp %22 : vector<8x128xf32>
    %cst_13 = arith.constant 1.000000e+00 : f32
    %24 = vector.broadcast %cst_13 : f32 to vector<8x128xf32>
    %25 = arith.addf %24, %23 : vector<8x128xf32>
    %26 = arith.divf %24, %25 : vector<8x128xf32>
    %27 = vector.extract_strided_slice %14 {offsets = [0, 256], sizes = [8, 128], strides = [1, 1]} : vector<8x512xf32> to vector<8x128xf32>
    %28 = math.tanh %27 : vector<8x128xf32>
    %29 = vector.extract_strided_slice %14 {offsets = [0, 384], sizes = [8, 128], strides = [1, 1]} : vector<8x512xf32> to vector<8x128xf32>
    %30 = arith.negf %29 : vector<8x128xf32>
    %31 = math.exp %30 : vector<8x128xf32>
    %cst_14 = arith.constant 1.000000e+00 : f32
    %32 = vector.broadcast %cst_14 : f32 to vector<8x128xf32>
    %33 = arith.addf %32, %31 : vector<8x128xf32>
    %34 = arith.divf %32, %33 : vector<8x128xf32>
    %c0_15 = arith.constant 0 : index
    %c0_16 = arith.constant 0 : index
    %35 = vector.load %arg10[%c0_15, %c0_16] : memref<8x128xf32, #tpu.memory_space<vmem>>, vector<8x128xf32>
    %36 = arith.mulf %26, %35 : vector<8x128xf32>
    %37 = arith.mulf %20, %28 : vector<8x128xf32>
    %38 = arith.addf %36, %37 : vector<8x128xf32>
    %39 = math.tanh %38 : vector<8x128xf32>
    %40 = arith.mulf %34, %39 : vector<8x128xf32>
    %c0_17 = arith.constant 0 : index
    %c0_18 = arith.constant 0 : index
    %41 = vector.load %arg10[%c0_17, %c0_18] : memref<8x128xf32, #tpu.memory_space<vmem>>, vector<8x128xf32>
    tpu.vector_store %arg10[%c0_17, %c0_18], %38 {strides = array<i32>} : memref<8x128xf32, #tpu.memory_space<vmem>>, vector<8x128xf32>,
    %c0_19 = arith.constant 0 : index
    %c0_20 = arith.constant 0 : index
    %42 = vector.load %arg9[%c0_19, %c0_20] : memref<8x128xf32, #tpu.memory_space<vmem>>, vector<8x128xf32>
    tpu.vector_store %arg9[%c0_19, %c0_20], %40 {strides = array<i32>} : memref<8x128xf32, #tpu.memory_space<vmem>>, vector<8x128xf32>,
    %43 = arith.truncf %40 : vector<8x128xf32> to vector<8x128xbf16>
    %c0_21 = arith.constant 0 : index
    %c0_22 = arith.constant 0 : index
    %44 = vector.load %arg6[%c0_21, %c0_22] : memref<128x128xbf16, #tpu.memory_space<vmem>>, vector<128x128xbf16>
    %cst_23 = arith.constant dense<0.000000e+00> : vector<8x128xf32>
    %45 = tpu.matmul %43, %44, %cst_23 {dimension_numbers = #tpu.dot_dimension_numbers<[1], [0], [0], [1], [0, 0, 1, 1], [], []>} : vector<8x128xbf16>, vector<128x128xbf16>, vector<8x128xf32> -> vector<8x128xf32>
    %c0_24 = arith.constant 0 : index
    %c0_25 = arith.constant 0 : index
    %46 = vector.load %arg7[%c0_24, %c0_25] : memref<1x128xf32, #tpu.memory_space<vmem>>, vector<1x128xf32>
    %47 = vector.broadcast %46 : vector<1x128xf32> to vector<8x128xf32>
    %48 = arith.addf %45, %47 : vector<8x128xf32>
    %c0_26 = arith.constant 0 : index
    %c0_27 = arith.constant 0 : index
    %c0_28 = arith.constant 0 : index
    %49 = vector.load %arg8[%c0_26, %c0_27, %c0_28] : memref<1x8x128xf32, #tpu.memory_space<vmem>>, vector<1x8x128xf32>
    %50 = vector.shape_cast %49 : vector<1x8x128xf32> to vector<8x128xf32>
    %51 = vector.shape_cast %48 : vector<8x128xf32> to vector<1x8x128xf32>
    tpu.vector_store %arg8[%c0_26, %c0_27, %c0_28], %51 {strides = array<i32>} : memref<1x8x128xf32, #tpu.memory_space<vmem>>, vector<1x8x128xf32>,
    return
  }
  func.func @transform_0(%arg0: i32, %arg1: i32) -> (i32, i32, i32) {
    %c0_i32 = arith.constant 0 : i32
    %c0_i32_0 = arith.constant 0 : i32
    return %arg1, %arg0, %c0_i32 : i32, i32, i32
  }
  func.func @transform_1(%arg0: i32, %arg1: i32) -> (i32, i32) {
    %c0_i32 = arith.constant 0 : i32
    %c0_i32_0 = arith.constant 0 : i32
    %c0_i32_1 = arith.constant 0 : i32
    return %c0_i32, %c0_i32_0 : i32, i32
  }
  func.func @transform_2(%arg0: i32, %arg1: i32) -> (i32, i32) {
    %c0_i32 = arith.constant 0 : i32
    %c0_i32_0 = arith.constant 0 : i32
    %c0_i32_1 = arith.constant 0 : i32
    return %c0_i32, %c0_i32_0 : i32, i32
  }
  func.func @transform_3(%arg0: i32, %arg1: i32) -> (i32, i32) {
    %c0_i32 = arith.constant 0 : i32
    %c0_i32_0 = arith.constant 0 : i32
    %c0_i32_1 = arith.constant 0 : i32
    return %c0_i32, %c0_i32_0 : i32, i32
  }
  func.func @transform_4(%arg0: i32, %arg1: i32) -> (i32, i32) {
    %c0_i32 = arith.constant 0 : i32
    %c0_i32_0 = arith.constant 0 : i32
    %c0_i32_1 = arith.constant 0 : i32
    return %c0_i32, %c0_i32_0 : i32, i32
  }
  func.func @transform_5(%arg0: i32, %arg1: i32) -> (i32, i32) {
    %c0_i32 = arith.constant 0 : i32
    %c0_i32_0 = arith.constant 0 : i32
    %c0_i32_1 = arith.constant 0 : i32
    return %c0_i32, %c0_i32_0 : i32, i32
  }
  func.func @transform_6(%arg0: i32, %arg1: i32) -> (i32, i32, i32) {
    %c0_i32 = arith.constant 0 : i32
    %c0_i32_0 = arith.constant 0 : i32
    return %arg1, %arg0, %c0_i32 : i32, i32, i32
  }
}

</mosaic_0001>

<llo_original>
// kernel: lstm_forward.1
$region0: #{lstm_forward.1}
  #allocation0 [shape = 'u32[]', space=smem, size = 0x4, offset = 0x4, fixed_abs, tag = 'smem constant byte address 0x4 - core index']
  #allocation1 [shape = 'u32[144,128]{1,0:T(1,128)}', space=vmem, size = 0x12000, scoped, tag = 'internal scratch']
  #allocation2 [shape = 'f32[8,128]{1,0:T(8,128)}', space=vmem, size = 0x1000, scoped, tag = 'scratch operand']
  #allocation3 [shape = 'f32[8,128]{1,0:T(8,128)}', space=vmem, size = 0x1000, scoped, tag = 'scratch operand']
  %s0 = inlined_call_operand.vmem [shape: bf16[10,8,768], index: 0, kind: input, shape index: {}]
  %s1 = inlined_call_operand.vmem [shape: bf16[768,512], index: 1, kind: input, shape index: {}]
  %s2 = inlined_call_operand.vmem [shape: bf16[128,512], index: 2, kind: input, shape index: {}]
  %s3 = inlined_call_operand.vmem [shape: f32[1,512], index: 3, kind: input, shape index: {}]
  %s4 = inlined_call_operand.vmem [shape: bf16[128,128], index: 4, kind: input, shape index: {}]
  %s5 = inlined_call_operand.vmem [shape: f32[1,128], index: 5, kind: input, shape index: {}]
  %s6 = inlined_call_operand.hbm [shape: f32[10,8,128], index: 6, kind: output, shape index: {}]
  %s7 = sld [smem:[#allocation0]]
  $region61: #{lstm_forward.1} parent=0
    _
  %s9 = ssub.s32 1, %s7
  %s10 = scalar_select 0, %s9, %s7
  $region1: #{lstm_forward.1} parent=0
    #allocation4 [shape = 'u8[8192]{0}', space=vmem, size = 0x2000, scoped, tag = 'output window, operand 0']
    #allocation5 [shape = 's32[2]{0}', space=sflag, size = 0x8, scoped, tag = 'scoped memory for lstm_forward.1']
    %11 = vsyncpa [#allocation5], 0
    %s12 = scalar_lea.sflag [#allocation5], 1
    %13 = vsyncpa %s12, 0
    loop: start=0, step=1, limit=12
    $region2: #{lstm_forward.1} parent=1 // loop_pre_header
      _
    $region3: #{lstm_forward.1} parent=1 // loop_header
      %s15 = sphi 0, %s19
      %p16 = scmp.ge.s32.totalorder %s15, 12
      %s22 = sphi 0, %s34
      %s23 = sphi 0, %s30
      %s24 = sphi 0, %s22
      %s25 = sphi 0, %s23
      %s26 = sphi 0, %s24
      %s27 = sphi 0, %s25
      %s39 = sphi 0, %s41
      %s42 = sphi 0, %s39
      %s43 = sphi 0, %s42
      %s59 = sphi 0, %s43
      %s63 = sphi 0, %s63
      %s65 = sphi 0, %s63
      %s66 = sphi 0, %s65
      %s80 = sphi 0, %s66
      %s84 = sphi 0, %s84
      %s86 = sphi 0, %s84
      %s87 = sphi 0, %s86
      %s101 = sphi 0, %s87
      %s105 = sphi 0, %s105
      %s107 = sphi 0, %s105
      %s108 = sphi 0, %s107
      %s122 = sphi 0, %s108
      %s126 = sphi 0, %s126
      %s128 = sphi 0, %s126
      %s129 = sphi 0, %s128
      %s143 = sphi 0, %s129
      %s147 = sphi 0, %s147
      %s149 = sphi 0, %s147
      %s150 = sphi 0, %s149
      %s164 = sphi 0, %s150
      %s172 = sphi 0, %s174
      %s175 = sphi 0, %s172
      %s176 = sphi 0, %s175
      %s192 = sphi 0, %s176
    $region4: #{lstm_forward.1} parent=1 // loop_header_branch
      %18 = sbr.rel (%p16) target = $region8
    $region5: #{lstm_forward.1} parent=1 // loop_body
      %s20 = ssub.s32 %s15, 1
      %s21 = ssub.s32 %s15, 2
      %s28 = sadd.s32 1, %s23
      %p29 = scmp.ge.s32.totalorder %s28, 10
      %s30 = scalar_select %p29, 0, %s28
      %s31 = sadd.s32 1, %s22
      %s32 = scalar_select %p29, %s31, %s22
      %p33 = scmp.ge.s32.totalorder %s32, 1
      %s34 = scalar_select %p33, 0, %s32
      %s35 = ssub.s32 %s23, %s30
      %s36 = ssub.s32 %s22, %s34
      %s37 = sor.u32 %s35, %s36
      %p38 = scmp.eq.s32.totalorder %s37, 0
      %s40 = sadd.s32 %s39, 1
      %s41 = scalar_select %p38, %s39, %s40
      %p44 = pneg %p38
      %p45 = scmp.eq.s32.totalorder %s15, 9
      %p46 = por %p44, %p45
      %p47 = scmp.ne.s32.totalorder %s39, %s42
      %p48 = scmp.eq.s32.totalorder %s15, 0
      %p49 = por %p47, %p48
      %p50 = scmp.ne.s32.totalorder %s39, %s42
      %p51 = scmp.eq.s32.totalorder %s20, 9
      %p52 = por %p50, %p51
      %p53 = scmp.ne.s32.totalorder %s42, %s43
      %p54 = scmp.eq.s32.totalorder %s20, 0
      %p55 = por %p53, %p54
      %p56 = scmp.ne.s32.totalorder %s42, %s43
      %p57 = scmp.eq.s32.totalorder %s21, 9
      %p58 = por %p56, %p57
      %p60 = scmp.ne.s32.totalorder %s43, %s59
      %p61 = scmp.eq.s32.totalorder %s21, 0
      %p62 = por %p60, %p61
      %s64 = sadd.s32 %s63, 1
      %p67 = scmp.eq.s32.totalorder %s15, 9
      %p68 = scmp.ne.s32.totalorder %s63, %s65
      %p69 = scmp.eq.s32.totalorder %s15, 0
      %p70 = por %p68, %p69
      %p71 = scmp.ne.s32.totalorder %s63, %s65
      %p72 = scmp.eq.s32.totalorder %s20, 9
      %p73 = por %p71, %p72
      %p74 = scmp.ne.s32.totalorder %s65, %s66
      %p75 = scmp.eq.s32.totalorder %s20, 0
      %p76 = por %p74, %p75
      %p77 = scmp.ne.s32.totalorder %s65, %s66
      %p78 = scmp.eq.s32.totalorder %s21, 9
      %p79 = por %p77, %p78
      %p81 = scmp.ne.s32.totalorder %s66, %s80
      %p82 = scmp.eq.s32.totalorder %s21, 0
      %p83 = por %p81, %p82
      %s85 = sadd.s32 %s84, 1
      %p88 = scmp.eq.s32.totalorder %s15, 9
      %p89 = scmp.ne.s32.totalorder %s84, %s86
      %p90 = scmp.eq.s32.totalorder %s15, 0
      %p91 = por %p89, %p90
      %p92 = scmp.ne.s32.totalorder %s84, %s86
      %p93 = scmp.eq.s32.totalorder %s20, 9
      %p94 = por %p92, %p93
      %p95 = scmp.ne.s32.totalorder %s86, %s87
      %p96 = scmp.eq.s32.totalorder %s20, 0
      %p97 = por %p95, %p96
      %p98 = scmp.ne.s32.totalorder %s86, %s87
      %p99 = scmp.eq.s32.totalorder %s21, 9
      %p100 = por %p98, %p99
      %p102 = scmp.ne.s32.totalorder %s87, %s101
      %p103 = scmp.eq.s32.totalorder %s21, 0
      %p104 = por %p102, %p103
      %s106 = sadd.s32 %s105, 1
      %p109 = scmp.eq.s32.totalorder %s15, 9
      %p110 = scmp.ne.s32.totalorder %s105, %s107
      %p111 = scmp.eq.s32.totalorder %s15, 0
      %p112 = por %p110, %p111
      %p113 = scmp.ne.s32.totalorder %s105, %s107
      %p114 = scmp.eq.s32.totalorder %s20, 9
      %p115 = por %p113, %p114
      %p116 = scmp.ne.s32.totalorder %s107, %s108
      %p117 = scmp.eq.s32.totalorder %s20, 0
      %p118 = por %p116, %p117
      %p119 = scmp.ne.s32.totalorder %s107, %s108
      %p120 = scmp.eq.s32.totalorder %s21, 9
      %p121 = por %p119, %p120
      %p123 = scmp.ne.s32.totalorder %s108, %s122
      %p124 = scmp.eq.s32.totalorder %s21, 0
      %p125 = por %p123, %p124
      %s127 = sadd.s32 %s126, 1
      %p130 = scmp.eq.s32.totalorder %s15, 9
      %p131 = scmp.ne.s32.totalorder %s126, %s128
      %p132 = scmp.eq.s32.totalorder %s15, 0
      %p133 = por %p131, %p132
      %p134 = scmp.ne.s32.totalorder %s126, %s128
      %p135 = scmp.eq.s32.totalorder %s20, 9
      %p136 = por %p134, %p135
      %p137 = scmp.ne.s32.totalorder %s128, %s129
      %p138 = scmp.eq.s32.totalorder %s20, 0
      %p139 = por %p137, %p138
      %p140 = scmp.ne.s32.totalorder %s128, %s129
      %p141 = scmp.eq.s32.totalorder %s21, 9
      %p142 = por %p140, %p141
      %p144 = scmp.ne.s32.totalorder %s129, %s143
      %p145 = scmp.eq.s32.totalorder %s21, 0
      %p146 = por %p144, %p145
      %s148 = sadd.s32 %s147, 1
      %p151 = scmp.eq.s32.totalorder %s15, 9
      %p152 = scmp.ne.s32.totalorder %s147, %s149
      %p153 = scmp.eq.s32.totalorder %s15, 0
      %p154 = por %p152, %p153
      %p155 = scmp.ne.s32.totalorder %s147, %s149
      %p156 = scmp.eq.s32.totalorder %s20, 9
      %p157 = por %p155, %p156
      %p158 = scmp.ne.s32.totalorder %s149, %s150
      %p159 = scmp.eq.s32.totalorder %s20, 0
      %p160 = por %p158, %p159
      %p161 = scmp.ne.s32.totalorder %s149, %s150
      %p162 = scmp.eq.s32.totalorder %s21, 9
      %p163 = por %p161, %p162
      %p165 = scmp.ne.s32.totalorder %s150, %s164
      %p166 = scmp.eq.s32.totalorder %s21, 0
      %p167 = por %p165, %p166
      %s168 = ssub.s32 %s23, %s30
      %s169 = ssub.s32 %s22, %s34
      %s170 = sor.u32 %s168, %s169
      %p171 = scmp.eq.s32.totalorder %s170, 0
      %s173 = sadd.s32 %s172, 1
      %s174 = scalar_select %p171, %s172, %s173
      %p177 = pneg %p171
      %p178 = scmp.eq.s32.totalorder %s15, 9
      %p179 = por %p177, %p178
      %p180 = scmp.ne.s32.totalorder %s172, %s175
      %p181 = scmp.eq.s32.totalorder %s15, 0
      %p182 = por %p180, %p181
      %p183 = scmp.ne.s32.totalorder %s172, %s175
      %p184 = scmp.eq.s32.totalorder %s20, 9
      %p185 = por %p183, %p184
      %p186 = scmp.ne.s32.totalorder %s175, %s176
      %p187 = scmp.eq.s32.totalorder %s20, 0
      %p188 = por %p186, %p187
      %p189 = scmp.ne.s32.totalorder %s175, %s176
      %p190 = scmp.eq.s32.totalorder %s21, 9
      %p191 = por %p189, %p190
      %p193 = scmp.ne.s32.totalorder %s176, %s192
      %p194 = scmp.eq.s32.totalorder %s21, 0
      %p195 = por %p193, %p194
      %p196 = scmp.le.s32.totalorder 1, %s15
      %p197 = scmp.lt.s32.totalorder %s15, 11
      %p198 = pnand %p196, %p197
      %p199 = pneg %p198
      // Predicated region
      $region9: #{lstm_forward.1} parent=5 // pred_check
        _
      $region10: #{lstm_forward.1} parent=5 // pred_check_branch
        %201 = sbr.rel (%p198) target = $region12
      $region11: #{lstm_forward.1} parent=5 // pred_region
        %s202 = ssub.s32 %s15, 1
        // Predicated region
        $region13: #{lstm_forward.1} parent=11 // pred_check
          %p203 = pneg %p76
        $region14: #{lstm_forward.1} parent=11 // pred_check_branch
          %205 = sbr.rel (%p203) target = $region16
        $region15: #{lstm_forward.1} parent=11 // pred_region
          _
        $region16: #{lstm_forward.1} parent=11 // pred_fallthru
          _
        // Predicated region
        $region17: #{lstm_forward.1} parent=11 // pred_check
          %p206 = pneg %p97
        $region18: #{lstm_forward.1} parent=11 // pred_check_branch
          %208 = sbr.rel (%p206) target = $region20
        $region19: #{lstm_forward.1} parent=11 // pred_region
          _
        $region20: #{lstm_forward.1} parent=11 // pred_fallthru
          _
        // Predicated region
        $region21: #{lstm_forward.1} parent=11 // pred_check
          %p209 = pneg %p118
        $region22: #{lstm_forward.1} parent=11 // pred_check_branch
          %211 = sbr.rel (%p209) target = $region24
        $region23: #{lstm_forward.1} parent=11 // pred_region
          _
        $region24: #{lstm_forward.1} parent=11 // pred_fallthru
          _
        // Predicated region
        $region25: #{lstm_forward.1} parent=11 // pred_check
          %p212 = pneg %p139
        $region26: #{lstm_forward.1} parent=11 // pred_check_branch
          %214 = sbr.rel (%p212) target = $region28
        $region27: #{lstm_forward.1} parent=11 // pred_region
          _
        $region28: #{lstm_forward.1} parent=11 // pred_fallthru
          _
        // Predicated region
        $region29: #{lstm_forward.1} parent=11 // pred_check
          %p215 = pneg %p160
        $region30: #{lstm_forward.1} parent=11 // pred_check_branch
          %217 = sbr.rel (%p215) target = $region32
        $region31: #{lstm_forward.1} parent=11 // pred_region
          _
        $region32: #{lstm_forward.1} parent=11 // pred_fallthru
          _
      $region12: #{lstm_forward.1} parent=5 // pred_fallthru
        _
      %p218 = scmp.lt.s32.totalorder %s15, 10
      // Predicated region
      $region33: #{lstm_forward.1} parent=5 // pred_check
        %p219 = pneg %p218
      $region34: #{lstm_forward.1} parent=5 // pred_check_branch
        %221 = sbr.rel (%p219) target = $region36
      $region35: #{lstm_forward.1} parent=5 // pred_region
        // Predicated region
        $region37: #{lstm_forward.1} parent=35 // pred_check
          %p222 = pneg %p49
        $region38: #{lstm_forward.1} parent=35 // pred_check_branch
          %224 = sbr.rel (%p222) target = $region40
        $region39: #{lstm_forward.1} parent=35 // pred_region
          %p225 = scmp.lt.s32.totalorder %s23, 9
          %s226 = scalar_select %p225, %s23, 9
          %p227 = scmp.lt.s32.totalorder %s22, 0
          %s228 = scalar_select %p227, %s22, 0
          %s229 = smul.addr %s228, 6
          %s230 = smul.addr %s226, 6
          %s231 = sadd.s32 %s229, %s230
          %s232 = smul.addr %s231, 4
          %s233 = scalar_lea.vmem %s0, %s232
        $region40: #{lstm_forward.1} parent=35 // pred_fallthru
          _
      $region36: #{lstm_forward.1} parent=5 // pred_fallthru
        _
      %p234 = scmp.le.s32.totalorder 1, %s15
      %p235 = scmp.lt.s32.totalorder %s15, 11
      %p236 = pnand %p234, %p235
      %p237 = pneg %p236
      // Predicated region
      $region41: #{lstm_forward.1} parent=5 // pred_check
        _
      $region42: #{lstm_forward.1} parent=5 // pred_check_branch
        %239 = sbr.rel (%p236) target = $region44
      $region43: #{lstm_forward.1} parent=5 // pred_region
        %s240 = ssub.s32 %s15, 1
        %p241 = scmp.lt.s32.totalorder %s25, 9
        %s242 = scalar_select %p241, %s25, 9
        %p243 = scmp.lt.s32.totalorder %s24, 0
        %s244 = scalar_select %p243, %s24, 0
        %s245 = smul.addr %s244, 6
        %s246 = smul.addr %s242, 6
        %s247 = sadd.s32 %s245, %s246
        %s248 = smul.addr %s247, 4
        %s249 = scalar_lea.vmem %s0, %s248
        %p250 = pneg %p55
        %p251 = pneg %p52
        %p252 = pneg %p76
        %p253 = pneg %p73
        %p254 = pneg %p97
        %p255 = pneg %p94
        %p256 = pneg %p118
        %p257 = pneg %p115
        %p258 = pneg %p139
        %p259 = pneg %p136
        %p260 = pneg %p160
        %p261 = pneg %p157
        %p262 = pneg %p188
        %p263 = pneg %p185
        %s264 = sand.u32 %s175, 1
        %s265 = scalar_lea.sflag [#allocation5], %s264
        %s266 = sand.u32 %s175, 1
        %s267 = smul.addr %s266, 8
        %s268 = scalar_lea.vmem [#allocation4], %s267
        %p269 = scmp.lt.s32.totalorder %s25, 9
        %s270 = scalar_select %p269, %s25, 9
        %p271 = scmp.lt.s32.totalorder %s24, 0
        %s272 = scalar_select %p271, %s24, 0
        %s273 = smul.addr %s272, 6
        %s274 = smul.addr %s270, 6
        %s275 = sadd.s32 %s273, %s274
        %s276 = smul.addr %s275, 4
        %s277 = scalar_lea.vmem %s0, %s276
        %p279 = scmp.eq.s32.totalorder %s25, 0
        // Predicated region
        $region45: #{lstm_forward.1} parent=43 // pred_check
          %p280 = pneg %p279
        $region46: #{lstm_forward.1} parent=43 // pred_check_branch
          %282 = sbr.rel (%p280) target = $region48
        $region47: #{lstm_forward.1} parent=43 // pred_region
          %283 = vst [vmem:[#allocation2] sm:$0xff] 0.0
          %284 = vst [vmem:[#allocation3] sm:$0xff] 0.0
        $region48: #{lstm_forward.1} parent=43 // pred_fallthru
          _
        %v285 = vld [vmem:[%s277] sm:$0xff]
        %v286 = vld [vmem:[%s277 + $0x8] sm:$0xff]
        %v287 = vld [vmem:[%s277 + $0x10] sm:$0xff]
        %v288 = vld [vmem:[#allocation2] sm:$0xff]
        %v289 = vld [vmem:[%s1] sm:$0xff]
        %v290 = vld [vmem:[%s1 + $0x8] sm:$0xff]
        %v291 = vld [vmem:[%s1 + $0x10] sm:$0xff]
        %v292 = vld [vmem:[%s1 + $0x18] sm:$0xff]
        %v293 = vld [vmem:[%s1 + $0x20] sm:$0xff]
        %v294 = vld [vmem:[%s1 + $0x28] sm:$0xff]
        %v295 = vld [vmem:[%s1 + $0x30] sm:$0xff]
        %v296 = vld [vmem:[%s1 + $0x38] sm:$0xff]
        %v297 = vld [vmem:[%s1 + $0x40] sm:$0xff]
        %v298 = vld [vmem:[%s1 + $0x48] sm:$0xff]
        %v299 = vld [vmem:[%s1 + $0x50] sm:$0xff]
        %v300 = vld [vmem:[%s1 + $0x58] sm:$0xff]
        %v301 = vld [vmem:[%s1 + $0x60] sm:$0xff]
        %v302 = vld [vmem:[%s1 + $0x68] sm:$0xff]
        %v303 = vld [vmem:[%s1 + $0x70] sm:$0xff]
        %v304 = vld [vmem:[%s1 + $0x78] sm:$0xff]
        %v305 = vld [vmem:[%s1 + $0x80] sm:$0xff]
        %v306 = vld [vmem:[%s1 + $0x88] sm:$0xff]
        %v307 = vld [vmem:[%s1 + $0x90] sm:$0xff]
        %v308 = vld [vmem:[%s1 + $0x98] sm:$0xff]
        %v309 = vld [vmem:[%s1 + $0xa0] sm:$0xff]
        %v310 = vld [vmem:[%s1 + $0xa8] sm:$0xff]
        %v311 = vld [vmem:[%s1 + $0xb0] sm:$0xff]
        %v312 = vld [vmem:[%s1 + $0xb8] sm:$0xff]
        %v313 = vld [vmem:[%s1 + $0xc0] sm:$0xff]
        %v314 = vld [vmem:[%s1 + $0xc8] sm:$0xff]
        %v315 = vld [vmem:[%s1 + $0xd0] sm:$0xff]
        %v316 = vld [vmem:[%s1 + $0xd8] sm:$0xff]
        %v317 = vld [vmem:[%s1 + $0xe0] sm:$0xff]
        %v318 = vld [vmem:[%s1 + $0xe8] sm:$0xff]
        %v319 = vld [vmem:[%s1 + $0xf0] sm:$0xff]
        %v320 = vld [vmem:[%s1 + $0xf8] sm:$0xff]
        %v321 = vld [vmem:[%s1 + $0x100] sm:$0xff]
        %v322 = vld [vmem:[%s1 + $0x108] sm:$0xff]
        %v323 = vld [vmem:[%s1 + $0x110] sm:$0xff]
        %v324 = vld [vmem:[%s1 + $0x118] sm:$0xff]
        %v325 = vld [vmem:[%s1 + $0x120] sm:$0xff]
        %v326 = vld [vmem:[%s1 + $0x128] sm:$0xff]
        %v327 = vld [vmem:[%s1 + $0x130] sm:$0xff]
        %v328 = vld [vmem:[%s1 + $0x138] sm:$0xff]
        %v329 = vld [vmem:[%s1 + $0x140] sm:$0xff]
        %v330 = vld [vmem:[%s1 + $0x148] sm:$0xff]
        %v331 = vld [vmem:[%s1 + $0x150] sm:$0xff]
        %v332 = vld [vmem:[%s1 + $0x158] sm:$0xff]
        %v333 = vld [vmem:[%s1 + $0x160] sm:$0xff]
        %v334 = vld [vmem:[%s1 + $0x168] sm:$0xff]
        %v335 = vld [vmem:[%s1 + $0x170] sm:$0xff]
        %v336 = vld [vmem:[%s1 + $0x178] sm:$0xff]
        %v337 = vld [vmem:[%s1 + $0x180] sm:$0xff]
        %v338 = vld [vmem:[%s1 + $0x188] sm:$0xff]
        %v339 = vld [vmem:[%s1 + $0x190] sm:$0xff]
        %v340 = vld [vmem:[%s1 + $0x198] sm:$0xff]
        %v341 = vld [vmem:[%s1 + $0x1a0] sm:$0xff]
        %v342 = vld [vmem:[%s1 + $0x1a8] sm:$0xff]
        %v343 = vld [vmem:[%s1 + $0x1b0] sm:$0xff]
        %v344 = vld [vmem:[%s1 + $0x1b8] sm:$0xff]
        %v345 = vld [vmem:[%s1 + $0x1c0] sm:$0xff]
        %v346 = vld [vmem:[%s1 + $0x1c8] sm:$0xff]
        %v347 = vld [vmem:[%s1 + $0x1d0] sm:$0xff]
        %v348 = vld [vmem:[%s1 + $0x1d8] sm:$0xff]
        %v349 = vld [vmem:[%s1 + $0x1e0] sm:$0xff]
        %v350 = vld [vmem:[%s1 + $0x1e8] sm:$0xff]
        %v351 = vld [vmem:[%s1 + $0x1f0] sm:$0xff]
        %v352 = vld [vmem:[%s1 + $0x1f8] sm:$0xff]
        %v353 = vld [vmem:[%s1 + $0x200] sm:$0xff]
        %v354 = vld [vmem:[%s1 + $0x208] sm:$0xff]
        %v355 = vld [vmem:[%s1 + $0x210] sm:$0xff]
        %v356 = vld [vmem:[%s1 + $0x218] sm:$0xff]
        %v357 = vld [vmem:[%s1 + $0x220] sm:$0xff]
        %v358 = vld [vmem:[%s1 + $0x228] sm:$0xff]
        %v359 = vld [vmem:[%s1 + $0x230] sm:$0xff]
        %v360 = vld [vmem:[%s1 + $0x238] sm:$0xff]
        %v361 = vld [vmem:[%s1 + $0x240] sm:$0xff]
        %v362 = vld [vmem:[%s1 + $0x248] sm:$0xff]
        %v363 = vld [vmem:[%s1 + $0x250] sm:$0xff]
        %v364 = vld [vmem:[%s1 + $0x258] sm:$0xff]
        %v365 = vld [vmem:[%s1 + $0x260] sm:$0xff]
        %v366 = vld [vmem:[%s1 + $0x268] sm:$0xff]
        %v367 = vld [vmem:[%s1 + $0x270] sm:$0xff]
        %v368 = vld [vmem:[%s1 + $0x278] sm:$0xff]
        %v369 = vld [vmem:[%s1 + $0x280] sm:$0xff]
        %v370 = vld [vmem:[%s1 + $0x288] sm:$0xff]
        %v371 = vld [vmem:[%s1 + $0x290] sm:$0xff]
        %v372 = vld [vmem:[%s1 + $0x298] sm:$0xff]
        %v373 = vld [vmem:[%s1 + $0x2a0] sm:$0xff]
        %v374 = vld [vmem:[%s1 + $0x2a8] sm:$0xff]
        %v375 = vld [vmem:[%s1 + $0x2b0] sm:$0xff]
        %v376 = vld [vmem:[%s1 + $0x2b8] sm:$0xff]
        %v377 = vld [vmem:[%s1 + $0x2c0] sm:$0xff]
        %v378 = vld [vmem:[%s1 + $0x2c8] sm:$0xff]
        %v379 = vld [vmem:[%s1 + $0x2d0] sm:$0xff]
        %v380 = vld [vmem:[%s1 + $0x2d8] sm:$0xff]
        %v381 = vld [vmem:[%s1 + $0x2e0] sm:$0xff]
        %v382 = vld [vmem:[%s1 + $0x2e8] sm:$0xff]
        %v383 = vld [vmem:[%s1 + $0x2f0] sm:$0xff]
        %v384 = vld [vmem:[%s1 + $0x2f8] sm:$0xff]
        %v385 = vld [vmem:[%s1 + $0x300] sm:$0xff]
        %v386 = vld [vmem:[%s1 + $0x308] sm:$0xff]
        %v387 = vld [vmem:[%s1 + $0x310] sm:$0xff]
        %v388 = vld [vmem:[%s1 + $0x318] sm:$0xff]
        %v389 = vld [vmem:[%s1 + $0x320] sm:$0xff]
        %v390 = vld [vmem:[%s1 + $0x328] sm:$0xff]
        %v391 = vld [vmem:[%s1 + $0x330] sm:$0xff]
        %v392 = vld [vmem:[%s1 + $0x338] sm:$0xff]
        %v393 = vld [vmem:[%s1 + $0x340] sm:$0xff]
        %v394 = vld [vmem:[%s1 + $0x348] sm:$0xff]
        %v395 = vld [vmem:[%s1 + $0x350] sm:$0xff]
        %v396 = vld [vmem:[%s1 + $0x358] sm:$0xff]
        %v397 = vld [vmem:[%s1 + $0x360] sm:$0xff]
        %v398 = vld [vmem:[%s1 + $0x368] sm:$0xff]
        %v399 = vld [vmem:[%s1 + $0x370] sm:$0xff]
        %v400 = vld [vmem:[%s1 + $0x378] sm:$0xff]
        %v401 = vld [vmem:[%s1 + $0x380] sm:$0xff]
        %v402 = vld [vmem:[%s1 + $0x388] sm:$0xff]
        %v403 = vld [vmem:[%s1 + $0x390] sm:$0xff]
        %v404 = vld [vmem:[%s1 + $0x398] sm:$0xff]
        %v405 = vld [vmem:[%s1 + $0x3a0] sm:$0xff]
        %v406 = vld [vmem:[%s1 + $0x3a8] sm:$0xff]
        %v407 = vld [vmem:[%s1 + $0x3b0] sm:$0xff]
        %v408 = vld [vmem:[%s1 + $0x3b8] sm:$0xff]
        %v409 = vld [vmem:[%s1 + $0x3c0] sm:$0xff]
        %v410 = vld [vmem:[%s1 + $0x3c8] sm:$0xff]
        %v411 = vld [vmem:[%s1 + $0x3d0] sm:$0xff]
        %v412 = vld [vmem:[%s1 + $0x3d8] sm:$0xff]
        %v413 = vld [vmem:[%s1 + $0x3e0] sm:$0xff]
        %v414 = vld [vmem:[%s1 + $0x3e8] sm:$0xff]
        %v415 = vld [vmem:[%s1 + $0x3f0] sm:$0xff]
        %v416 = vld [vmem:[%s1 + $0x3f8] sm:$0xff]
        %v417 = vld [vmem:[%s1 + $0x400] sm:$0xff]
        %v418 = vld [vmem:[%s1 + $0x408] sm:$0xff]
        %v419 = vld [vmem:[%s1 + $0x410] sm:$0xff]
        %v420 = vld [vmem:[%s1 + $0x418] sm:$0xff]
        %v421 = vld [vmem:[%s1 + $0x420] sm:$0xff]
        %v422 = vld [vmem:[%s1 + $0x428] sm:$0xff]
        %v423 = vld [vmem:[%s1 + $0x430] sm:$0xff]
        %v424 = vld [vmem:[%s1 + $0x438] sm:$0xff]
        %v425 = vld [vmem:[%s1 + $0x440] sm:$0xff]
        %v426 = vld [vmem:[%s1 + $0x448] sm:$0xff]
        %v427 = vld [vmem:[%s1 + $0x450] sm:$0xff]
        %v428 = vld [vmem:[%s1 + $0x458] sm:$0xff]
        %v429 = vld [vmem:[%s1 + $0x460] sm:$0xff]
        %v430 = vld [vmem:[%s1 + $0x468] sm:$0xff]
        %v431 = vld [vmem:[%s1 + $0x470] sm:$0xff]
        %v432 = vld [vmem:[%s1 + $0x478] sm:$0xff]
        %v433 = vld [vmem:[%s1 + $0x480] sm:$0xff]
        %v434 = vld [vmem:[%s1 + $0x488] sm:$0xff]
        %v435 = vld [vmem:[%s1 + $0x490] sm:$0xff]
        %v436 = vld [vmem:[%s1 + $0x498] sm:$0xff]
        %v437 = vld [vmem:[%s1 + $0x4a0] sm:$0xff]
        %v438 = vld [vmem:[%s1 + $0x4a8] sm:$0xff]
        %v439 = vld [vmem:[%s1 + $0x4b0] sm:$0xff]
        %v440 = vld [vmem:[%s1 + $0x4b8] sm:$0xff]
        %v441 = vld [vmem:[%s1 + $0x4c0] sm:$0xff]
        %v442 = vld [vmem:[%s1 + $0x4c8] sm:$0xff]
        %v443 = vld [vmem:[%s1 + $0x4d0] sm:$0xff]
        %v444 = vld [vmem:[%s1 + $0x4d8] sm:$0xff]
        %v445 = vld [vmem:[%s1 + $0x4e0] sm:$0xff]
        %v446 = vld [vmem:[%s1 + $0x4e8] sm:$0xff]
        %v447 = vld [vmem:[%s1 + $0x4f0] sm:$0xff]
        %v448 = vld [vmem:[%s1 + $0x4f8] sm:$0xff]
        %v449 = vld [vmem:[%s1 + $0x500] sm:$0xff]
        %v450 = vld [vmem:[%s1 + $0x508] sm:$0xff]
        %v451 = vld [vmem:[%s1 + $0x510] sm:$0xff]
        %v452 = vld [vmem:[%s1 + $0x518] sm:$0xff]
        %v453 = vld [vmem:[%s1 + $0x520] sm:$0xff]
        %v454 = vld [vmem:[%s1 + $0x528] sm:$0xff]
        %v455 = vld [vmem:[%s1 + $0x530] sm:$0xff]
        %v456 = vld [vmem:[%s1 + $0x538] sm:$0xff]
        %v457 = vld [vmem:[%s1 + $0x540] sm:$0xff]
        %v458 = vld [vmem:[%s1 + $0x548] sm:$0xff]
        %v459 = vld [vmem:[%s1 + $0x550] sm:$0xff]
        %v460 = vld [vmem:[%s1 + $0x558] sm:$0xff]
        %v461 = vld [vmem:[%s1 + $0x560] sm:$0xff]
        %v462 = vld [vmem:[%s1 + $0x568] sm:$0xff]
        %v463 = vld [vmem:[%s1 + $0x570] sm:$0xff]
        %v464 = vld [vmem:[%s1 + $0x578] sm:$0xff]
        %v465 = vld [vmem:[%s1 + $0x580] sm:$0xff]
        %v466 = vld [vmem:[%s1 + $0x588] sm:$0xff]
        %v467 = vld [vmem:[%s1 + $0x590] sm:$0xff]
        %v468 = vld [vmem:[%s1 + $0x598] sm:$0xff]
        %v469 = vld [vmem:[%s1 + $0x5a0] sm:$0xff]
        %v470 = vld [vmem:[%s1 + $0x5a8] sm:$0xff]
        %v471 = vld [vmem:[%s1 + $0x5b0] sm:$0xff]
        %v472 = vld [vmem:[%s1 + $0x5b8] sm:$0xff]
        %v473 = vld [vmem:[%s1 + $0x5c0] sm:$0xff]
        %v474 = vld [vmem:[%s1 + $0x5c8] sm:$0xff]
        %v475 = vld [vmem:[%s1 + $0x5d0] sm:$0xff]
        %v476 = vld [vmem:[%s1 + $0x5d8] sm:$0xff]
        %v477 = vld [vmem:[%s1 + $0x5e0] sm:$0xff]
        %v478 = vld [vmem:[%s1 + $0x5e8] sm:$0xff]
        %v479 = vld [vmem:[%s1 + $0x5f0] sm:$0xff]
        %v480 = vld [vmem:[%s1 + $0x5f8] sm:$0xff]
        %v481 = vpack.c.bf16 %v288, %v288
        %v482 = vld [vmem:[%s2] sm:$0xff]
        %v483 = vld [vmem:[%s2 + $0x8] sm:$0xff]
        %v484 = vld [vmem:[%s2 + $0x10] sm:$0xff]
        %v485 = vld [vmem:[%s2 + $0x18] sm:$0xff]
        %v486 = vld [vmem:[%s2 + $0x20] sm:$0xff]
        %v487 = vld [vmem:[%s2 + $0x28] sm:$0xff]
        %v488 = vld [vmem:[%s2 + $0x30] sm:$0xff]
        %v489 = vld [vmem:[%s2 + $0x38] sm:$0xff]
        %v490 = vld [vmem:[%s2 + $0x40] sm:$0xff]
        %v491 = vld [vmem:[%s2 + $0x48] sm:$0xff]
        %v492 = vld [vmem:[%s2 + $0x50] sm:$0xff]
        %v493 = vld [vmem:[%s2 + $0x58] sm:$0xff]
        %v494 = vld [vmem:[%s2 + $0x60] sm:$0xff]
        %v495 = vld [vmem:[%s2 + $0x68] sm:$0xff]
        %v496 = vld [vmem:[%s2 + $0x70] sm:$0xff]
        %v497 = vld [vmem:[%s2 + $0x78] sm:$0xff]
        %v498 = vld [vmem:[%s2 + $0x80] sm:$0xff]
        %v499 = vld [vmem:[%s2 + $0x88] sm:$0xff]
        %v500 = vld [vmem:[%s2 + $0x90] sm:$0xff]
        %v501 = vld [vmem:[%s2 + $0x98] sm:$0xff]
        %v502 = vld [vmem:[%s2 + $0xa0] sm:$0xff]
        %v503 = vld [vmem:[%s2 + $0xa8] sm:$0xff]
        %v504 = vld [vmem:[%s2 + $0xb0] sm:$0xff]
        %v505 = vld [vmem:[%s2 + $0xb8] sm:$0xff]
        %v506 = vld [vmem:[%s2 + $0xc0] sm:$0xff]
        %v507 = vld [vmem:[%s2 + $0xc8] sm:$0xff]
        %v508 = vld [vmem:[%s2 + $0xd0] sm:$0xff]
        %v509 = vld [vmem:[%s2 + $0xd8] sm:$0xff]
        %v510 = vld [vmem:[%s2 + $0xe0] sm:$0xff]
        %v511 = vld [vmem:[%s2 + $0xe8] sm:$0xff]
        %v512 = vld [vmem:[%s2 + $0xf0] sm:$0xff]
        %v513 = vld [vmem:[%s2 + $0xf8] sm:$0xff]
        %v546 = vunpack.c.l.b16 %v482
        %v547 = vunpack.c.h.b16 %v482
        %v548 = vunpack.c.l.b16 %v483
        %v549 = vunpack.c.h.b16 %v483
        %v550 = vunpack.c.l.b16 %v484
        %v551 = vunpack.c.h.b16 %v484
        %v552 = vunpack.c.l.b16 %v485
        %v553 = vunpack.c.h.b16 %v485
        %v554 = vunpack.c.l.b16 %v486
        %v555 = vunpack.c.h.b16 %v486
        %v556 = vunpack.c.l.b16 %v487
        %v557 = vunpack.c.h.b16 %v487
        %v558 = vunpack.c.l.b16 %v488
        %v559 = vunpack.c.h.b16 %v488
        %v560 = vunpack.c.l.b16 %v489
        %v561 = vunpack.c.h.b16 %v489
        %v562 = vunpack.c.l.b16 %v490
        %v563 = vunpack.c.h.b16 %v490
        %v564 = vunpack.c.l.b16 %v491
        %v565 = vunpack.c.h.b16 %v491
        %v566 = vunpack.c.l.b16 %v492
        %v567 = vunpack.c.h.b16 %v492
        %v568 = vunpack.c.l.b16 %v493
        %v569 = vunpack.c.h.b16 %v493
        %v570 = vunpack.c.l.b16 %v494
        %v571 = vunpack.c.h.b16 %v494
        %v572 = vunpack.c.l.b16 %v495
        %v573 = vunpack.c.h.b16 %v495
        %v574 = vunpack.c.l.b16 %v496
        %v575 = vunpack.c.h.b16 %v496
        %v576 = vunpack.c.l.b16 %v497
        %v577 = vunpack.c.h.b16 %v497
        %v578 = vunpack.c.l.b16 %v498
        %v579 = vunpack.c.h.b16 %v498
        %v580 = vunpack.c.l.b16 %v499
        %v581 = vunpack.c.h.b16 %v499
        %v582 = vunpack.c.l.b16 %v500
        %v583 = vunpack.c.h.b16 %v500
        %v584 = vunpack.c.l.b16 %v501
        %v585 = vunpack.c.h.b16 %v501
        %v586 = vunpack.c.l.b16 %v502
        %v587 = vunpack.c.h.b16 %v502
        %v588 = vunpack.c.l.b16 %v503
        %v589 = vunpack.c.h.b16 %v503
        %v590 = vunpack.c.l.b16 %v504
        %v591 = vunpack.c.h.b16 %v504
        %v592 = vunpack.c.l.b16 %v505
        %v593 = vunpack.c.h.b16 %v505
        %v594 = vunpack.c.l.b16 %v506
        %v595 = vunpack.c.h.b16 %v506
        %v596 = vunpack.c.l.b16 %v507
        %v597 = vunpack.c.h.b16 %v507
        %v598 = vunpack.c.l.b16 %v508
        %v599 = vunpack.c.h.b16 %v508
        %v600 = vunpack.c.l.b16 %v509
        %v601 = vunpack.c.h.b16 %v509
        %v602 = vunpack.c.l.b16 %v510
        %v603 = vunpack.c.h.b16 %v510
        %v604 = vunpack.c.l.b16 %v511
        %v605 = vunpack.c.h.b16 %v511
        %v606 = vunpack.c.l.b16 %v512
        %v607 = vunpack.c.h.b16 %v512
        %v608 = vunpack.c.l.b16 %v513
        %v609 = vunpack.c.h.b16 %v513
        %v610 = vpack.c.b16 %v550, %v546
        %v611 = vpack.c.b16 %v551, %v547
        %v612 = vpack.c.b16 %v552, %v548
        %v613 = vpack.c.b16 %v553, %v549
        %v614 = vpack.c.b16 %v558, %v554
        %v615 = vpack.c.b16 %v559, %v555
        %v616 = vpack.c.b16 %v560, %v556
        %v617 = vpack.c.b16 %v561, %v557
        %v618 = vpack.c.b16 %v566, %v562
        %v619 = vpack.c.b16 %v567, %v563
        %v620 = vpack.c.b16 %v568, %v564
        %v621 = vpack.c.b16 %v569, %v565
        %v622 = vpack.c.b16 %v574, %v570
        %v623 = vpack.c.b16 %v575, %v571
        %v624 = vpack.c.b16 %v576, %v572
        %v625 = vpack.c.b16 %v577, %v573
        %v626 = vpack.c.b16 %v582, %v578
        %v627 = vpack.c.b16 %v583, %v579
        %v628 = vpack.c.b16 %v584, %v580
        %v629 = vpack.c.b16 %v585, %v581
        %v630 = vpack.c.b16 %v590, %v586
        %v631 = vpack.c.b16 %v591, %v587
        %v632 = vpack.c.b16 %v592, %v588
        %v633 = vpack.c.b16 %v593, %v589
        %v634 = vpack.c.b16 %v598, %v594
        %v635 = vpack.c.b16 %v599, %v595
        %v636 = vpack.c.b16 %v600, %v596
        %v637 = vpack.c.b16 %v601, %v597
        %v638 = vpack.c.b16 %v606, %v602
        %v639 = vpack.c.b16 %v607, %v603
        %v640 = vpack.c.b16 %v608, %v604
        %v641 = vpack.c.b16 %v609, %v605
        %674 = vmatprep.subr.bf16.mxu0 %v611
        %675 = vmatpush1.bf16.msra.mxu0 %v610
        %676 = vmatprep.subr.bf16.mxu0 %v615
        %677 = vmatpush1.bf16.msra.mxu0 %v614
        %678 = vmatprep.subr.bf16.mxu0 %v619
        %679 = vmatpush1.bf16.msra.mxu0 %v618
        %680 = vmatprep.subr.bf16.mxu0 %v623
        %681 = vmatpush1.bf16.msra.mxu0 %v622
        %682 = vmatprep.subr.bf16.mxu0 %v627
        %683 = vmatpush1.bf16.msra.mxu0 %v626
        %684 = vmatprep.subr.bf16.mxu0 %v631
        %685 = vmatpush1.bf16.msra.mxu0 %v630
        %686 = vmatprep.subr.bf16.mxu0 %v635
        %687 = vmatpush1.bf16.msra.mxu0 %v634
        %688 = vmatprep.subr.bf16.mxu0 %v639
        %689 = vmatpush1.bf16.msra.mxu0 %v638
        %690 = vmatprep.subr.bf16.mxu0 0
        %691 = vmatpush1.bf16.msra.mxu0 0
        %692 = vmatprep.subr.bf16.mxu0 0
        %693 = vmatpush1.bf16.msra.mxu0 0
        %694 = vmatprep.subr.bf16.mxu0 0
        %695 = vmatpush1.bf16.msra.mxu0 0
        %696 = vmatprep.subr.bf16.mxu0 0
        %697 = vmatpush1.bf16.msra.mxu0 0
        %698 = vmatprep.subr.bf16.mxu0 0
        %699 = vmatpush1.bf16.msra.mxu0 0
        %700 = vmatprep.subr.bf16.mxu0 0
        %701 = vmatpush1.bf16.msra.mxu0 0
        %702 = vmatprep.subr.bf16.mxu0 0
        %703 = vmatpush1.bf16.msra.mxu0 0
        %704 = vmatprep.subr.bf16.mxu0 0
        %705 = vmatpush1.bf16.msra.mxu0 0
        %706 = vmatprep.mubr.bf16.mxu0 0
        %707 = vmatmul.mubr.bf16.gmra.mrb[0].mxu0 %v481
        %v708 = vpop.f32.mrb[0].mxu0
        %v709 = vadd.f32 0.0, %v708
        %v710 = vpop.f32.mrb[0].mxu0
        %v711 = vadd.f32 0.0, %v710
        %v712 = vpop.f32.mrb[0].mxu0
        %v713 = vpop.f32.mrb[0].mxu0
        %714 = vdwg.mxu0
        %715 = vmatprep.subr.bf16.mxu0 %v613
        %716 = vmatpush1.bf16.msra.mxu0 %v612
        %717 = vmatprep.subr.bf16.mxu0 %v617
        %718 = vmatpush1.bf16.msra.mxu0 %v616
        %719 = vmatprep.subr.bf16.mxu0 %v621
        %720 = vmatpush1.bf16.msra.mxu0 %v620
        %721 = vmatprep.subr.bf16.mxu0 %v625
        %722 = vmatpush1.bf16.msra.mxu0 %v624
        %723 = vmatprep.subr.bf16.mxu0 %v629
        %724 = vmatpush1.bf16.msra.mxu0 %v628
        %725 = vmatprep.subr.bf16.mxu0 %v633
        %726 = vmatpush1.bf16.msra.mxu0 %v632
        %727 = vmatprep.subr.bf16.mxu0 %v637
        %728 = vmatpush1.bf16.msra.mxu0 %v636
        %729 = vmatprep.subr.bf16.mxu0 %v641
        %730 = vmatpush1.bf16.msra.mxu0 %v640
        %731 = vmatprep.subr.bf16.mxu0 0
        %732 = vmatpush1.bf16.msra.mxu0 0
        %733 = vmatprep.subr.bf16.mxu0 0
        %734 = vmatpush1.bf16.msra.mxu0 0
        %735 = vmatprep.subr.bf16.mxu0 0
        %736 = vmatpush1.bf16.msra.mxu0 0
        %737 = vmatprep.subr.bf16.mxu0 0
        %738 = vmatpush1.bf16.msra.mxu0 0
        %739 = vmatprep.subr.bf16.mxu0 0
        %740 = vmatpush1.bf16.msra.mxu0 0
        %741 = vmatprep.subr.bf16.mxu0 0
        %742 = vmatpush1.bf16.msra.mxu0 0
        %743 = vmatprep.subr.bf16.mxu0 0
        %744 = vmatpush1.bf16.msra.mxu0 0
        %745 = vmatprep.subr.bf16.mxu0 0
        %746 = vmatpush1.bf16.msra.mxu0 0
        %747 = vmatprep.mubr.bf16.mxu0 0
        %748 = vmatmul.mubr.bf16.gmra.mrb[0].mxu0 %v481
        %v749 = vpop.f32.mrb[0].mxu0
        %v750 = vadd.f32 0.0, %v749
        %v751 = vpop.f32.mrb[0].mxu0
        %v752 = vadd.f32 0.0, %v751
        %v753 = vpop.f32.mrb[0].mxu0
        %v754 = vpop.f32.mrb[0].mxu0
        %755 = vdwg.mxu0
        %v759 = vunpack.c.l.b16 %v285
        %v760 = vunpack.c.h.b16 %v285
        %v761 = vunpack.c.l.b16 %v286
        %v762 = vunpack.c.h.b16 %v286
        %v763 = vunpack.c.l.b16 %v287
        %v764 = vunpack.c.h.b16 %v287
        %v765 = vpack.c.b16 %v759, %v759
        %v766 = vpack.c.b16 %v760, %v760
        %v767 = vpack.c.b16 %v761, %v761
        %v768 = vpack.c.b16 %v762, %v762
        %v769 = vpack.c.b16 %v763, %v763
        %v770 = vpack.c.b16 %v764, %v764
        %v969 = vunpack.c.l.b16 %v289
        %v970 = vunpack.c.h.b16 %v289
        %v971 = vunpack.c.l.b16 %v290
        %v972 = vunpack.c.h.b16 %v290
        %v973 = vunpack.c.l.b16 %v291
        %v974 = vunpack.c.h.b16 %v291
        %v975 = vunpack.c.l.b16 %v292
        %v976 = vunpack.c.h.b16 %v292
        %v977 = vunpack.c.l.b16 %v293
        %v978 = vunpack.c.h.b16 %v293
        %v979 = vunpack.c.l.b16 %v294
        %v980 = vunpack.c.h.b16 %v294
        %v981 = vunpack.c.l.b16 %v295
        %v982 = vunpack.c.h.b16 %v295
        %v983 = vunpack.c.l.b16 %v296
        %v984 = vunpack.c.h.b16 %v296
        %v985 = vunpack.c.l.b16 %v297
        %v986 = vunpack.c.h.b16 %v297
        %v987 = vunpack.c.l.b16 %v298
        %v988 = vunpack.c.h.b16 %v298
        %v989 = vunpack.c.l.b16 %v299
        %v990 = vunpack.c.h.b16 %v299
        %v991 = vunpack.c.l.b16 %v300
        %v992 = vunpack.c.h.b16 %v300
        %v993 = vunpack.c.l.b16 %v301
        %v994 = vunpack.c.h.b16 %v301
        %v995 = vunpack.c.l.b16 %v302
        %v996 = vunpack.c.h.b16 %v302
        %v997 = vunpack.c.l.b16 %v303
        %v998 = vunpack.c.h.b16 %v303
        %v999 = vunpack.c.l.b16 %v304
        %v1000 = vunpack.c.h.b16 %v304
        %v1001 = vunpack.c.l.b16 %v305
        %v1002 = vunpack.c.h.b16 %v305
        %v1003 = vunpack.c.l.b16 %v306
        %v1004 = vunpack.c.h.b16 %v306
        %v1005 = vunpack.c.l.b16 %v307
        %v1006 = vunpack.c.h.b16 %v307
        %v1007 = vunpack.c.l.b16 %v308
        %v1008 = vunpack.c.h.b16 %v308
        %v1009 = vunpack.c.l.b16 %v309
        %v1010 = vunpack.c.h.b16 %v309
        %v1011 = vunpack.c.l.b16 %v310
        %v1012 = vunpack.c.h.b16 %v310
        %v1013 = vunpack.c.l.b16 %v311
        %v1014 = vunpack.c.h.b16 %v311
        %v1015 = vunpack.c.l.b16 %v312
        %v1016 = vunpack.c.h.b16 %v312
        %v1017 = vunpack.c.l.b16 %v313
        %v1018 = vunpack.c.h.b16 %v313
        %v1019 = vunpack.c.l.b16 %v314
        %v1020 = vunpack.c.h.b16 %v314
        %v1021 = vunpack.c.l.b16 %v315
        %v1022 = vunpack.c.h.b16 %v315
        %v1023 = vunpack.c.l.b16 %v316
        %v1024 = vunpack.c.h.b16 %v316
        %v1025 = vunpack.c.l.b16 %v317
        %v1026 = vunpack.c.h.b16 %v317
        %v1027 = vunpack.c.l.b16 %v318
        %v1028 = vunpack.c.h.b16 %v318
        %v1029 = vunpack.c.l.b16 %v319
        %v1030 = vunpack.c.h.b16 %v319
        %v1031 = vunpack.c.l.b16 %v320
        %v1032 = vunpack.c.h.b16 %v320
        %v1033 = vunpack.c.l.b16 %v321
        %v1034 = vunpack.c.h.b16 %v321
        %v1035 = vunpack.c.l.b16 %v322
        %v1036 = vunpack.c.h.b16 %v322
        %v1037 = vunpack.c.l.b16 %v323
        %v1038 = vunpack.c.h.b16 %v323
        %v1039 = vunpack.c.l.b16 %v324
        %v1040 = vunpack.c.h.b16 %v324
        %v1041 = vunpack.c.l.b16 %v325
        %v1042 = vunpack.c.h.b16 %v325
        %v1043 = vunpack.c.l.b16 %v326
        %v1044 = vunpack.c.h.b16 %v326
        %v1045 = vunpack.c.l.b16 %v327
        %v1046 = vunpack.c.h.b16 %v327
        %v1047 = vunpack.c.l.b16 %v328
        %v1048 = vunpack.c.h.b16 %v328
        %v1049 = vunpack.c.l.b16 %v329
        %v1050 = vunpack.c.h.b16 %v329
        %v1051 = vunpack.c.l.b16 %v330
        %v1052 = vunpack.c.h.b16 %v330
        %v1053 = vunpack.c.l.b16 %v331
        %v1054 = vunpack.c.h.b16 %v331
        %v1055 = vunpack.c.l.b16 %v332
        %v1056 = vunpack.c.h.b16 %v332
        %v1057 = vunpack.c.l.b16 %v333
        %v1058 = vunpack.c.h.b16 %v333
        %v1059 = vunpack.c.l.b16 %v334
        %v1060 = vunpack.c.h.b16 %v334
        %v1061 = vunpack.c.l.b16 %v335
        %v1062 = vunpack.c.h.b16 %v335
        %v1063 = vunpack.c.l.b16 %v336
        %v1064 = vunpack.c.h.b16 %v336
        %v1065 = vunpack.c.l.b16 %v337
        %v1066 = vunpack.c.h.b16 %v337
        %v1067 = vunpack.c.l.b16 %v338
        %v1068 = vunpack.c.h.b16 %v338
        %v1069 = vunpack.c.l.b16 %v339
        %v1070 = vunpack.c.h.b16 %v339
        %v1071 = vunpack.c.l.b16 %v340
        %v1072 = vunpack.c.h.b16 %v340
        %v1073 = vunpack.c.l.b16 %v341
        %v1074 = vunpack.c.h.b16 %v341
        %v1075 = vunpack.c.l.b16 %v342
        %v1076 = vunpack.c.h.b16 %v342
        %v1077 = vunpack.c.l.b16 %v343
        %v1078 = vunpack.c.h.b16 %v343
        %v1079 = vunpack.c.l.b16 %v344
        %v1080 = vunpack.c.h.b16 %v344
        %v1081 = vunpack.c.l.b16 %v345
        %v1082 = vunpack.c.h.b16 %v345
        %v1083 = vunpack.c.l.b16 %v346
        %v1084 = vunpack.c.h.b16 %v346
        %v1085 = vunpack.c.l.b16 %v347
        %v1086 = vunpack.c.h.b16 %v347
        %v1087 = vunpack.c.l.b16 %v348
        %v1088 = vunpack.c.h.b16 %v348
        %v1089 = vunpack.c.l.b16 %v349
        %v1090 = vunpack.c.h.b16 %v349
        %v1091 = vunpack.c.l.b16 %v350
        %v1092 = vunpack.c.h.b16 %v350
        %v1093 = vunpack.c.l.b16 %v351
        %v1094 = vunpack.c.h.b16 %v351
        %v1095 = vunpack.c.l.b16 %v352
        %v1096 = vunpack.c.h.b16 %v352
        %v1097 = vunpack.c.l.b16 %v353
        %v1098 = vunpack.c.h.b16 %v353
        %v1099 = vunpack.c.l.b16 %v354
        %v1100 = vunpack.c.h.b16 %v354
        %v1101 = vunpack.c.l.b16 %v355
        %v1102 = vunpack.c.h.b16 %v355
        %v1103 = vunpack.c.l.b16 %v356
        %v1104 = vunpack.c.h.b16 %v356
        %v1105 = vunpack.c.l.b16 %v357
        %v1106 = vunpack.c.h.b16 %v357
        %v1107 = vunpack.c.l.b16 %v358
        %v1108 = vunpack.c.h.b16 %v358
        %v1109 = vunpack.c.l.b16 %v359
        %v1110 = vunpack.c.h.b16 %v359
        %v1111 = vunpack.c.l.b16 %v360
        %v1112 = vunpack.c.h.b16 %v360
        %v1113 = vunpack.c.l.b16 %v361
        %v1114 = vunpack.c.h.b16 %v361
        %v1115 = vunpack.c.l.b16 %v362
        %v1116 = vunpack.c.h.b16 %v362
        %v1117 = vunpack.c.l.b16 %v363
        %v1118 = vunpack.c.h.b16 %v363
        %v1119 = vunpack.c.l.b16 %v364
        %v1120 = vunpack.c.h.b16 %v364
        %v1121 = vunpack.c.l.b16 %v365
        %v1122 = vunpack.c.h.b16 %v365
        %v1123 = vunpack.c.l.b16 %v366
        %v1124 = vunpack.c.h.b16 %v366
        %v1125 = vunpack.c.l.b16 %v367
        %v1126 = vunpack.c.h.b16 %v367
        %v1127 = vunpack.c.l.b16 %v368
        %v1128 = vunpack.c.h.b16 %v368
        %v1129 = vunpack.c.l.b16 %v369
        %v1130 = vunpack.c.h.b16 %v369
        %v1131 = vunpack.c.l.b16 %v370
        %v1132 = vunpack.c.h.b16 %v370
        %v1133 = vunpack.c.l.b16 %v371
        %v1134 = vunpack.c.h.b16 %v371
        %v1135 = vunpack.c.l.b16 %v372
        %v1136 = vunpack.c.h.b16 %v372
        %v1137 = vunpack.c.l.b16 %v373
        %v1138 = vunpack.c.h.b16 %v373
        %v1139 = vunpack.c.l.b16 %v374
        %v1140 = vunpack.c.h.b16 %v374
        %v1141 = vunpack.c.l.b16 %v375
        %v1142 = vunpack.c.h.b16 %v375
        %v1143 = vunpack.c.l.b16 %v376
        %v1144 = vunpack.c.h.b16 %v376
        %v1145 = vunpack.c.l.b16 %v377
        %v1146 = vunpack.c.h.b16 %v377
        %v1147 = vunpack.c.l.b16 %v378
        %v1148 = vunpack.c.h.b16 %v378
        %v1149 = vunpack.c.l.b16 %v379
        %v1150 = vunpack.c.h.b16 %v379
        %v1151 = vunpack.c.l.b16 %v380
        %v1152 = vunpack.c.h.b16 %v380
        %v1153 = vunpack.c.l.b16 %v381
        %v1154 = vunpack.c.h.b16 %v381
        %v1155 = vunpack.c.l.b16 %v382
        %v1156 = vunpack.c.h.b16 %v382
        %v1157 = vunpack.c.l.b16 %v383
        %v1158 = vunpack.c.h.b16 %v383
        %v1159 = vunpack.c.l.b16 %v384
        %v1160 = vunpack.c.h.b16 %v384
        %v1161 = vunpack.c.l.b16 %v385
        %v1162 = vunpack.c.h.b16 %v385
        %v1163 = vunpack.c.l.b16 %v386
        %v1164 = vunpack.c.h.b16 %v386
        %v1165 = vunpack.c.l.b16 %v387
        %v1166 = vunpack.c.h.b16 %v387
        %v1167 = vunpack.c.l.b16 %v388
        %v1168 = vunpack.c.h.b16 %v388
        %v1169 = vunpack.c.l.b16 %v389
        %v1170 = vunpack.c.h.b16 %v389
        %v1171 = vunpack.c.l.b16 %v390
        %v1172 = vunpack.c.h.b16 %v390
        %v1173 = vunpack.c.l.b16 %v391
        %v1174 = vunpack.c.h.b16 %v391
        %v1175 = vunpack.c.l.b16 %v392
        %v1176 = vunpack.c.h.b16 %v392
        %v1177 = vunpack.c.l.b16 %v393
        %v1178 = vunpack.c.h.b16 %v393
        %v1179 = vunpack.c.l.b16 %v394
        %v1180 = vunpack.c.h.b16 %v394
        %v1181 = vunpack.c.l.b16 %v395
        %v1182 = vunpack.c.h.b16 %v395
        %v1183 = vunpack.c.l.b16 %v396
        %v1184 = vunpack.c.h.b16 %v396
        %v1185 = vunpack.c.l.b16 %v397
        %v1186 = vunpack.c.h.b16 %v397
        %v1187 = vunpack.c.l.b16 %v398
        %v1188 = vunpack.c.h.b16 %v398
        %v1189 = vunpack.c.l.b16 %v399
        %v1190 = vunpack.c.h.b16 %v399
        %v1191 = vunpack.c.l.b16 %v400
        %v1192 = vunpack.c.h.b16 %v400
        %v1193 = vunpack.c.l.b16 %v401
        %v1194 = vunpack.c.h.b16 %v401
        %v1195 = vunpack.c.l.b16 %v402
        %v1196 = vunpack.c.h.b16 %v402
        %v1197 = vunpack.c.l.b16 %v403
        %v1198 = vunpack.c.h.b16 %v403
        %v1199 = vunpack.c.l.b16 %v404
        %v1200 = vunpack.c.h.b16 %v404
        %v1201 = vunpack.c.l.b16 %v405
        %v1202 = vunpack.c.h.b16 %v405
        %v1203 = vunpack.c.l.b16 %v406
        %v1204 = vunpack.c.h.b16 %v406
        %v1205 = vunpack.c.l.b16 %v407
        %v1206 = vunpack.c.h.b16 %v407
        %v1207 = vunpack.c.l.b16 %v408
        %v1208 = vunpack.c.h.b16 %v408
        %v1209 = vunpack.c.l.b16 %v409
        %v1210 = vunpack.c.h.b16 %v409
        %v1211 = vunpack.c.l.b16 %v410
        %v1212 = vunpack.c.h.b16 %v410
        %v1213 = vunpack.c.l.b16 %v411
        %v1214 = vunpack.c.h.b16 %v411
        %v1215 = vunpack.c.l.b16 %v412
        %v1216 = vunpack.c.h.b16 %v412
        %v1217 = vunpack.c.l.b16 %v413
        %v1218 = vunpack.c.h.b16 %v413
        %v1219 = vunpack.c.l.b16 %v414
        %v1220 = vunpack.c.h.b16 %v414
        %v1221 = vunpack.c.l.b16 %v415
        %v1222 = vunpack.c.h.b16 %v415
        %v1223 = vunpack.c.l.b16 %v416
        %v1224 = vunpack.c.h.b16 %v416
        %v1225 = vunpack.c.l.b16 %v417
        %v1226 = vunpack.c.h.b16 %v417
        %v1227 = vunpack.c.l.b16 %v418
        %v1228 = vunpack.c.h.b16 %v418
        %v1229 = vunpack.c.l.b16 %v419
        %v1230 = vunpack.c.h.b16 %v419
        %v1231 = vunpack.c.l.b16 %v420
        %v1232 = vunpack.c.h.b16 %v420
        %v1233 = vunpack.c.l.b16 %v421
        %v1234 = vunpack.c.h.b16 %v421
        %v1235 = vunpack.c.l.b16 %v422
        %v1236 = vunpack.c.h.b16 %v422
        %v1237 = vunpack.c.l.b16 %v423
        %v1238 = vunpack.c.h.b16 %v423
        %v1239 = vunpack.c.l.b16 %v424
        %v1240 = vunpack.c.h.b16 %v424
        %v1241 = vunpack.c.l.b16 %v425
        %v1242 = vunpack.c.h.b16 %v425
        %v1243 = vunpack.c.l.b16 %v426
        %v1244 = vunpack.c.h.b16 %v426
        %v1245 = vunpack.c.l.b16 %v427
        %v1246 = vunpack.c.h.b16 %v427
        %v1247 = vunpack.c.l.b16 %v428
        %v1248 = vunpack.c.h.b16 %v428
        %v1249 = vunpack.c.l.b16 %v429
        %v1250 = vunpack.c.h.b16 %v429
        %v1251 = vunpack.c.l.b16 %v430
        %v1252 = vunpack.c.h.b16 %v430
        %v1253 = vunpack.c.l.b16 %v431
        %v1254 = vunpack.c.h.b16 %v431
        %v1255 = vunpack.c.l.b16 %v432
        %v1256 = vunpack.c.h.b16 %v432
        %v1257 = vunpack.c.l.b16 %v433
        %v1258 = vunpack.c.h.b16 %v433
        %v1259 = vunpack.c.l.b16 %v434
        %v1260 = vunpack.c.h.b16 %v434
        %v1261 = vunpack.c.l.b16 %v435
        %v1262 = vunpack.c.h.b16 %v435
        %v1263 = vunpack.c.l.b16 %v436
        %v1264 = vunpack.c.h.b16 %v436
        %v1265 = vunpack.c.l.b16 %v437
        %v1266 = vunpack.c.h.b16 %v437
        %v1267 = vunpack.c.l.b16 %v438
        %v1268 = vunpack.c.h.b16 %v438
        %v1269 = vunpack.c.l.b16 %v439
        %v1270 = vunpack.c.h.b16 %v439
        %v1271 = vunpack.c.l.b16 %v440
        %v1272 = vunpack.c.h.b16 %v440
        %v1273 = vunpack.c.l.b16 %v441
        %v1274 = vunpack.c.h.b16 %v441
        %v1275 = vunpack.c.l.b16 %v442
        %v1276 = vunpack.c.h.b16 %v442
        %v1277 = vunpack.c.l.b16 %v443
        %v1278 = vunpack.c.h.b16 %v443
        %v1279 = vunpack.c.l.b16 %v444
        %v1280 = vunpack.c.h.b16 %v444
        %v1281 = vunpack.c.l.b16 %v445
        %v1282 = vunpack.c.h.b16 %v445
        %v1283 = vunpack.c.l.b16 %v446
        %v1284 = vunpack.c.h.b16 %v446
        %v1285 = vunpack.c.l.b16 %v447
        %v1286 = vunpack.c.h.b16 %v447
        %v1287 = vunpack.c.l.b16 %v448
        %v1288 = vunpack.c.h.b16 %v448
        %v1289 = vunpack.c.l.b16 %v449
        %v1290 = vunpack.c.h.b16 %v449
        %v1291 = vunpack.c.l.b16 %v450
        %v1292 = vunpack.c.h.b16 %v450
        %v1293 = vunpack.c.l.b16 %v451
        %v1294 = vunpack.c.h.b16 %v451
        %v1295 = vunpack.c.l.b16 %v452
        %v1296 = vunpack.c.h.b16 %v452
        %v1297 = vunpack.c.l.b16 %v453
        %v1298 = vunpack.c.h.b16 %v453
        %v1299 = vunpack.c.l.b16 %v454
        %v1300 = vunpack.c.h.b16 %v454
        %v1301 = vunpack.c.l.b16 %v455
        %v1302 = vunpack.c.h.b16 %v455
        %v1303 = vunpack.c.l.b16 %v456
        %v1304 = vunpack.c.h.b16 %v456
        %v1305 = vunpack.c.l.b16 %v457
        %v1306 = vunpack.c.h.b16 %v457
        %v1307 = vunpack.c.l.b16 %v458
        %v1308 = vunpack.c.h.b16 %v458
        %v1309 = vunpack.c.l.b16 %v459
        %v1310 = vunpack.c.h.b16 %v459
        %v1311 = vunpack.c.l.b16 %v460
        %v1312 = vunpack.c.h.b16 %v460
        %v1313 = vunpack.c.l.b16 %v461
        %v1314 = vunpack.c.h.b16 %v461
        %v1315 = vunpack.c.l.b16 %v462
        %v1316 = vunpack.c.h.b16 %v462
        %v1317 = vunpack.c.l.b16 %v463
        %v1318 = vunpack.c.h.b16 %v463
        %v1319 = vunpack.c.l.b16 %v464
        %v1320 = vunpack.c.h.b16 %v464
        %v1321 = vunpack.c.l.b16 %v465
        %v1322 = vunpack.c.h.b16 %v465
        %v1323 = vunpack.c.l.b16 %v466
        %v1324 = vunpack.c.h.b16 %v466
        %v1325 = vunpack.c.l.b16 %v467
        %v1326 = vunpack.c.h.b16 %v467
        %v1327 = vunpack.c.l.b16 %v468
        %v1328 = vunpack.c.h.b16 %v468
        %v1329 = vunpack.c.l.b16 %v469
        %v1330 = vunpack.c.h.b16 %v469
        %v1331 = vunpack.c.l.b16 %v470
        %v1332 = vunpack.c.h.b16 %v470
        %v1333 = vunpack.c.l.b16 %v471
        %v1334 = vunpack.c.h.b16 %v471
        %v1335 = vunpack.c.l.b16 %v472
        %v1336 = vunpack.c.h.b16 %v472
        %v1337 = vunpack.c.l.b16 %v473
        %v1338 = vunpack.c.h.b16 %v473
        %v1339 = vunpack.c.l.b16 %v474
        %v1340 = vunpack.c.h.b16 %v474
        %v1341 = vunpack.c.l.b16 %v475
        %v1342 = vunpack.c.h.b16 %v475
        %v1343 = vunpack.c.l.b16 %v476
        %v1344 = vunpack.c.h.b16 %v476
        %v1345 = vunpack.c.l.b16 %v477
        %v1346 = vunpack.c.h.b16 %v477
        %v1347 = vunpack.c.l.b16 %v478
        %v1348 = vunpack.c.h.b16 %v478
        %v1349 = vunpack.c.l.b16 %v479
        %v1350 = vunpack.c.h.b16 %v479
        %v1351 = vunpack.c.l.b16 %v480
        %v1352 = vunpack.c.h.b16 %v480
        %v1353 = vpack.c.b16 %v973, %v969
        %v1354 = vpack.c.b16 %v974, %v970
        %v1355 = vpack.c.b16 %v975, %v971
        %v1356 = vpack.c.b16 %v976, %v972
        %v1357 = vpack.c.b16 %v981, %v977
        %v1358 = vpack.c.b16 %v982, %v978
        %v1359 = vpack.c.b16 %v983, %v979
        %v1360 = vpack.c.b16 %v984, %v980
        %v1361 = vpack.c.b16 %v989, %v985
        %v1362 = vpack.c.b16 %v990, %v986
        %v1363 = vpack.c.b16 %v991, %v987
        %v1364 = vpack.c.b16 %v992, %v988
        %v1365 = vpack.c.b16 %v997, %v993
        %v1366 = vpack.c.b16 %v998, %v994
        %v1367 = vpack.c.b16 %v999, %v995
        %v1368 = vpack.c.b16 %v1000, %v996
        %v1369 = vpack.c.b16 %v1005, %v1001
        %v1370 = vpack.c.b16 %v1006, %v1002
        %v1371 = vpack.c.b16 %v1007, %v1003
        %v1372 = vpack.c.b16 %v1008, %v1004
        %v1373 = vpack.c.b16 %v1013, %v1009
        %v1374 = vpack.c.b16 %v1014, %v1010
        %v1375 = vpack.c.b16 %v1015, %v1011
        %v1376 = vpack.c.b16 %v1016, %v1012
        %v1377 = vpack.c.b16 %v1021, %v1017
        %v1378 = vpack.c.b16 %v1022, %v1018
        %v1379 = vpack.c.b16 %v1023, %v1019
        %v1380 = vpack.c.b16 %v1024, %v1020
        %v1381 = vpack.c.b16 %v1029, %v1025
        %v1382 = vpack.c.b16 %v1030, %v1026
        %v1383 = vpack.c.b16 %v1031, %v1027
        %v1384 = vpack.c.b16 %v1032, %v1028
        %v1385 = vpack.c.b16 %v1037, %v1033
        %v1386 = vpack.c.b16 %v1038, %v1034
        %v1387 = vpack.c.b16 %v1039, %v1035
        %v1388 = vpack.c.b16 %v1040, %v1036
        %v1389 = vpack.c.b16 %v1045, %v1041
        %v1390 = vpack.c.b16 %v1046, %v1042
        %v1391 = vpack.c.b16 %v1047, %v1043
        %v1392 = vpack.c.b16 %v1048, %v1044
        %v1393 = vpack.c.b16 %v1053, %v1049
        %v1394 = vpack.c.b16 %v1054, %v1050
        %v1395 = vpack.c.b16 %v1055, %v1051
        %v1396 = vpack.c.b16 %v1056, %v1052
        %v1397 = vpack.c.b16 %v1061, %v1057
        %v1398 = vpack.c.b16 %v1062, %v1058
        %v1399 = vpack.c.b16 %v1063, %v1059
        %v1400 = vpack.c.b16 %v1064, %v1060
        %v1401 = vpack.c.b16 %v1069, %v1065
        %v1402 = vpack.c.b16 %v1070, %v1066
        %v1403 = vpack.c.b16 %v1071, %v1067
        %v1404 = vpack.c.b16 %v1072, %v1068
        %v1405 = vpack.c.b16 %v1077, %v1073
        %v1406 = vpack.c.b16 %v1078, %v1074
        %v1407 = vpack.c.b16 %v1079, %v1075
        %v1408 = vpack.c.b16 %v1080, %v1076
        %v1409 = vpack.c.b16 %v1085, %v1081
        %v1410 = vpack.c.b16 %v1086, %v1082
        %v1411 = vpack.c.b16 %v1087, %v1083
        %v1412 = vpack.c.b16 %v1088, %v1084
        %v1413 = vpack.c.b16 %v1093, %v1089
        %v1414 = vpack.c.b16 %v1094, %v1090
        %v1415 = vpack.c.b16 %v1095, %v1091
        %v1416 = vpack.c.b16 %v1096, %v1092
        %v1417 = vpack.c.b16 %v1101, %v1097
        %v1418 = vpack.c.b16 %v1102, %v1098
        %v1419 = vpack.c.b16 %v1103, %v1099
        %v1420 = vpack.c.b16 %v1104, %v1100
        %v1421 = vpack.c.b16 %v1109, %v1105
        %v1422 = vpack.c.b16 %v1110, %v1106
        %v1423 = vpack.c.b16 %v1111, %v1107
        %v1424 = vpack.c.b16 %v1112, %v1108
        %v1425 = vpack.c.b16 %v1117, %v1113
        %v1426 = vpack.c.b16 %v1118, %v1114
        %v1427 = vpack.c.b16 %v1119, %v1115
        %v1428 = vpack.c.b16 %v1120, %v1116
        %v1429 = vpack.c.b16 %v1125, %v1121
        %v1430 = vpack.c.b16 %v1126, %v1122
        %v1431 = vpack.c.b16 %v1127, %v1123
        %v1432 = vpack.c.b16 %v1128, %v1124
        %v1433 = vpack.c.b16 %v1133, %v1129
        %v1434 = vpack.c.b16 %v1134, %v1130
        %v1435 = vpack.c.b16 %v1135, %v1131
        %v1436 = vpack.c.b16 %v1136, %v1132
        %v1437 = vpack.c.b16 %v1141, %v1137
        %v1438 = vpack.c.b16 %v1142, %v1138
        %v1439 = vpack.c.b16 %v1143, %v1139
        %v1440 = vpack.c.b16 %v1144, %v1140
        %v1441 = vpack.c.b16 %v1149, %v1145
        %v1442 = vpack.c.b16 %v1150, %v1146
        %v1443 = vpack.c.b16 %v1151, %v1147
        %v1444 = vpack.c.b16 %v1152, %v1148
        %v1445 = vpack.c.b16 %v1157, %v1153
        %v1446 = vpack.c.b16 %v1158, %v1154
        %v1447 = vpack.c.b16 %v1159, %v1155
        %v1448 = vpack.c.b16 %v1160, %v1156
        %v1449 = vpack.c.b16 %v1165, %v1161
        %v1450 = vpack.c.b16 %v1166, %v1162
        %v1451 = vpack.c.b16 %v1167, %v1163
        %v1452 = vpack.c.b16 %v1168, %v1164
        %v1453 = vpack.c.b16 %v1173, %v1169
        %v1454 = vpack.c.b16 %v1174, %v1170
        %v1455 = vpack.c.b16 %v1175, %v1171
        %v1456 = vpack.c.b16 %v1176, %v1172
        %v1457 = vpack.c.b16 %v1181, %v1177
        %v1458 = vpack.c.b16 %v1182, %v1178
        %v1459 = vpack.c.b16 %v1183, %v1179
        %v1460 = vpack.c.b16 %v1184, %v1180
        %v1461 = vpack.c.b16 %v1189, %v1185
        %v1462 = vpack.c.b16 %v1190, %v1186
        %v1463 = vpack.c.b16 %v1191, %v1187
        %v1464 = vpack.c.b16 %v1192, %v1188
        %v1465 = vpack.c.b16 %v1197, %v1193
        %v1466 = vpack.c.b16 %v1198, %v1194
        %v1467 = vpack.c.b16 %v1199, %v1195
        %v1468 = vpack.c.b16 %v1200, %v1196
        %v1469 = vpack.c.b16 %v1205, %v1201
        %v1470 = vpack.c.b16 %v1206, %v1202
        %v1471 = vpack.c.b16 %v1207, %v1203
        %v1472 = vpack.c.b16 %v1208, %v1204
        %v1473 = vpack.c.b16 %v1213, %v1209
        %v1474 = vpack.c.b16 %v1214, %v1210
        %v1475 = vpack.c.b16 %v1215, %v1211
        %v1476 = vpack.c.b16 %v1216, %v1212
        %v1477 = vpack.c.b16 %v1221, %v1217
        %v1478 = vpack.c.b16 %v1222, %v1218
        %v1479 = vpack.c.b16 %v1223, %v1219
        %v1480 = vpack.c.b16 %v1224, %v1220
        %v1481 = vpack.c.b16 %v1229, %v1225
        %v1482 = vpack.c.b16 %v1230, %v1226
        %v1483 = vpack.c.b16 %v1231, %v1227
        %v1484 = vpack.c.b16 %v1232, %v1228
        %v1485 = vpack.c.b16 %v1237, %v1233
        %v1486 = vpack.c.b16 %v1238, %v1234
        %v1487 = vpack.c.b16 %v1239, %v1235
        %v1488 = vpack.c.b16 %v1240, %v1236
        %v1489 = vpack.c.b16 %v1245, %v1241
        %v1490 = vpack.c.b16 %v1246, %v1242
        %v1491 = vpack.c.b16 %v1247, %v1243
        %v1492 = vpack.c.b16 %v1248, %v1244
        %v1493 = vpack.c.b16 %v1253, %v1249
        %v1494 = vpack.c.b16 %v1254, %v1250
        %v1495 = vpack.c.b16 %v1255, %v1251
        %v1496 = vpack.c.b16 %v1256, %v1252
        %v1497 = vpack.c.b16 %v1261, %v1257
        %v1498 = vpack.c.b16 %v1262, %v1258
        %v1499 = vpack.c.b16 %v1263, %v1259
        %v1500 = vpack.c.b16 %v1264, %v1260
        %v1501 = vpack.c.b16 %v1269, %v1265
        %v1502 = vpack.c.b16 %v1270, %v1266
        %v1503 = vpack.c.b16 %v1271, %v1267
        %v1504 = vpack.c.b16 %v1272, %v1268
        %v1505 = vpack.c.b16 %v1277, %v1273
        %v1506 = vpack.c.b16 %v1278, %v1274
        %v1507 = vpack.c.b16 %v1279, %v1275
        %v1508 = vpack.c.b16 %v1280, %v1276
        %v1509 = vpack.c.b16 %v1285, %v1281
        %v1510 = vpack.c.b16 %v1286, %v1282
        %v1511 = vpack.c.b16 %v1287, %v1283
        %v1512 = vpack.c.b16 %v1288, %v1284
        %v1513 = vpack.c.b16 %v1293, %v1289
        %v1514 = vpack.c.b16 %v1294, %v1290
        %v1515 = vpack.c.b16 %v1295, %v1291
        %v1516 = vpack.c.b16 %v1296, %v1292
        %v1517 = vpack.c.b16 %v1301, %v1297
        %v1518 = vpack.c.b16 %v1302, %v1298
        %v1519 = vpack.c.b16 %v1303, %v1299
        %v1520 = vpack.c.b16 %v1304, %v1300
        %v1521 = vpack.c.b16 %v1309, %v1305
        %v1522 = vpack.c.b16 %v1310, %v1306
        %v1523 = vpack.c.b16 %v1311, %v1307
        %v1524 = vpack.c.b16 %v1312, %v1308
        %v1525 = vpack.c.b16 %v1317, %v1313
        %v1526 = vpack.c.b16 %v1318, %v1314
        %v1527 = vpack.c.b16 %v1319, %v1315
        %v1528 = vpack.c.b16 %v1320, %v1316
        %v1529 = vpack.c.b16 %v1325, %v1321
        %v1530 = vpack.c.b16 %v1326, %v1322
        %v1531 = vpack.c.b16 %v1327, %v1323
        %v1532 = vpack.c.b16 %v1328, %v1324
        %v1533 = vpack.c.b16 %v1333, %v1329
        %v1534 = vpack.c.b16 %v1334, %v1330
        %v1535 = vpack.c.b16 %v1335, %v1331
        %v1536 = vpack.c.b16 %v1336, %v1332
        %v1537 = vpack.c.b16 %v1341, %v1337
        %v1538 = vpack.c.b16 %v1342, %v1338
        %v1539 = vpack.c.b16 %v1343, %v1339
        %v1540 = vpack.c.b16 %v1344, %v1340
        %v1541 = vpack.c.b16 %v1349, %v1345
        %v1542 = vpack.c.b16 %v1350, %v1346
        %v1543 = vpack.c.b16 %v1351, %v1347
        %v1544 = vpack.c.b16 %v1352, %v1348
        %1737 = vmatprep.subr.bf16.mxu0 %v1354
        %1738 = vmatpush1.bf16.msra.mxu0 %v1353
        %1739 = vmatprep.subr.bf16.mxu0 %v1358
        %1740 = vmatpush1.bf16.msra.mxu0 %v1357
        %1741 = vmatprep.subr.bf16.mxu0 %v1362
        %1742 = vmatpush1.bf16.msra.mxu0 %v1361
        %1743 = vmatprep.subr.bf16.mxu0 %v1366
        %1744 = vmatpush1.bf16.msra.mxu0 %v1365
        %1745 = vmatprep.subr.bf16.mxu0 %v1370
        %1746 = vmatpush1.bf16.msra.mxu0 %v1369
        %1747 = vmatprep.subr.bf16.mxu0 %v1374
        %1748 = vmatpush1.bf16.msra.mxu0 %v1373
        %1749 = vmatprep.subr.bf16.mxu0 %v1378
        %1750 = vmatpush1.bf16.msra.mxu0 %v1377
        %1751 = vmatprep.subr.bf16.mxu0 %v1382
        %1752 = vmatpush1.bf16.msra.mxu0 %v1381
        %1753 = vmatprep.subr.bf16.mxu0 %v1386
        %1754 = vmatpush1.bf16.msra.mxu0 %v1385
        %1755 = vmatprep.subr.bf16.mxu0 %v1390
        %1756 = vmatpush1.bf16.msra.mxu0 %v1389
        %1757 = vmatprep.subr.bf16.mxu0 %v1394
        %1758 = vmatpush1.bf16.msra.mxu0 %v1393
        %1759 = vmatprep.subr.bf16.mxu0 %v1398
        %1760 = vmatpush1.bf16.msra.mxu0 %v1397
        %1761 = vmatprep.subr.bf16.mxu0 %v1402
        %1762 = vmatpush1.bf16.msra.mxu0 %v1401
        %1763 = vmatprep.subr.bf16.mxu0 %v1406
        %1764 = vmatpush1.bf16.msra.mxu0 %v1405
        %1765 = vmatprep.subr.bf16.mxu0 %v1410
        %1766 = vmatpush1.bf16.msra.mxu0 %v1409
        %1767 = vmatprep.subr.bf16.mxu0 %v1414
        %1768 = vmatpush1.bf16.msra.mxu0 %v1413
        %1769 = vmatprep.mubr.bf16.mxu0 %v766
        %1770 = vmatmul.mubr.bf16.gmra.mrb[0].mxu0 %v765
        %v1771 = vpop.f32.mrb[0].mxu0
        %v1772 = vadd.f32 %v709, %v1771
        %v1773 = vpop.f32.mrb[0].mxu0
        %v1774 = vadd.f32 %v711, %v1773
        %v1775 = vpop.f32.mrb[0].mxu0
        %v1776 = vpop.f32.mrb[0].mxu0
        %1777 = vdwg.mxu0
        %1778 = vmatprep.subr.bf16.mxu0 %v1418
        %1779 = vmatpush1.bf16.msra.mxu0 %v1417
        %1780 = vmatprep.subr.bf16.mxu0 %v1422
        %1781 = vmatpush1.bf16.msra.mxu0 %v1421
        %1782 = vmatprep.subr.bf16.mxu0 %v1426
        %1783 = vmatpush1.bf16.msra.mxu0 %v1425
        %1784 = vmatprep.subr.bf16.mxu0 %v1430
        %1785 = vmatpush1.bf16.msra.mxu0 %v1429
        %1786 = vmatprep.subr.bf16.mxu0 %v1434
        %1787 = vmatpush1.bf16.msra.mxu0 %v1433
        %1788 = vmatprep.subr.bf16.mxu0 %v1438
        %1789 = vmatpush1.bf16.msra.mxu0 %v1437
        %1790 = vmatprep.subr.bf16.mxu0 %v1442
        %1791 = vmatpush1.bf16.msra.mxu0 %v1441
        %1792 = vmatprep.subr.bf16.mxu0 %v1446
        %1793 = vmatpush1.bf16.msra.mxu0 %v1445
        %1794 = vmatprep.subr.bf16.mxu0 %v1450
        %1795 = vmatpush1.bf16.msra.mxu0 %v1449
        %1796 = vmatprep.subr.bf16.mxu0 %v1454
        %1797 = vmatpush1.bf16.msra.mxu0 %v1453
        %1798 = vmatprep.subr.bf16.mxu0 %v1458
        %1799 = vmatpush1.bf16.msra.mxu0 %v1457
        %1800 = vmatprep.subr.bf16.mxu0 %v1462
        %1801 = vmatpush1.bf16.msra.mxu0 %v1461
        %1802 = vmatprep.subr.bf16.mxu0 %v1466
        %1803 = vmatpush1.bf16.msra.mxu0 %v1465
        %1804 = vmatprep.subr.bf16.mxu0 %v1470
        %1805 = vmatpush1.bf16.msra.mxu0 %v1469
        %1806 = vmatprep.subr.bf16.mxu0 %v1474
        %1807 = vmatpush1.bf16.msra.mxu0 %v1473
        %1808 = vmatprep.subr.bf16.mxu0 %v1478
        %1809 = vmatpush1.bf16.msra.mxu0 %v1477
        %1810 = vmatprep.mubr.bf16.mxu0 %v768
        %1811 = vmatmul.mubr.bf16.gmra.mrb[0].mxu0 %v767
        %v1812 = vpop.f32.mrb[0].mxu0
        %v1813 = vadd.f32 %v1772, %v1812
        %v1814 = vpop.f32.mrb[0].mxu0
        %v1815 = vadd.f32 %v1774, %v1814
        %v1816 = vpop.f32.mrb[0].mxu0
        %v1817 = vpop.f32.mrb[0].mxu0
        %1818 = vdwg.mxu0
        %1819 = vmatprep.subr.bf16.mxu0 %v1482
        %1820 = vmatpush1.bf16.msra.mxu0 %v1481
        %1821 = vmatprep.subr.bf16.mxu0 %v1486
        %1822 = vmatpush1.bf16.msra.mxu0 %v1485
        %1823 = vmatprep.subr.bf16.mxu0 %v1490
        %1824 = vmatpush1.bf16.msra.mxu0 %v1489
        %1825 = vmatprep.subr.bf16.mxu0 %v1494
        %1826 = vmatpush1.bf16.msra.mxu0 %v1493
        %1827 = vmatprep.subr.bf16.mxu0 %v1498
        %1828 = vmatpush1.bf16.msra.mxu0 %v1497
        %1829 = vmatprep.subr.bf16.mxu0 %v1502
        %1830 = vmatpush1.bf16.msra.mxu0 %v1501
        %1831 = vmatprep.subr.bf16.mxu0 %v1506
        %1832 = vmatpush1.bf16.msra.mxu0 %v1505
        %1833 = vmatprep.subr.bf16.mxu0 %v1510
        %1834 = vmatpush1.bf16.msra.mxu0 %v1509
        %1835 = vmatprep.subr.bf16.mxu0 %v1514
        %1836 = vmatpush1.bf16.msra.mxu0 %v1513
        %1837 = vmatprep.subr.bf16.mxu0 %v1518
        %1838 = vmatpush1.bf16.msra.mxu0 %v1517
        %1839 = vmatprep.subr.bf16.mxu0 %v1522
        %1840 = vmatpush1.bf16.msra.mxu0 %v1521
        %1841 = vmatprep.subr.bf16.mxu0 %v1526
        %1842 = vmatpush1.bf16.msra.mxu0 %v1525
        %1843 = vmatprep.subr.bf16.mxu0 %v1530
        %1844 = vmatpush1.bf16.msra.mxu0 %v1529
        %1845 = vmatprep.subr.bf16.mxu0 %v1534
        %1846 = vmatpush1.bf16.msra.mxu0 %v1533
        %1847 = vmatprep.subr.bf16.mxu0 %v1538
        %1848 = vmatpush1.bf16.msra.mxu0 %v1537
        %1849 = vmatprep.subr.bf16.mxu0 %v1542
        %1850 = vmatpush1.bf16.msra.mxu0 %v1541
        %1851 = vmatprep.mubr.bf16.mxu0 %v770
        %1852 = vmatmul.mubr.bf16.gmra.mrb[0].mxu0 %v769
        %v1853 = vpop.f32.mrb[0].mxu0
        %v1854 = vadd.f32 %v1813, %v1853
        %v1855 = vpop.f32.mrb[0].mxu0
        %v1856 = vadd.f32 %v1815, %v1855
        %v1857 = vpop.f32.mrb[0].mxu0
        %v1858 = vpop.f32.mrb[0].mxu0
        %1859 = vdwg.mxu0
        %1860 = vmatprep.subr.bf16.mxu0 %v1356
        %1861 = vmatpush1.bf16.msra.mxu0 %v1355
        %1862 = vmatprep.subr.bf16.mxu0 %v1360
        %1863 = vmatpush1.bf16.msra.mxu0 %v1359
        %1864 = vmatprep.subr.bf16.mxu0 %v1364
        %1865 = vmatpush1.bf16.msra.mxu0 %v1363
        %1866 = vmatprep.subr.bf16.mxu0 %v1368
        %1867 = vmatpush1.bf16.msra.mxu0 %v1367
        %1868 = vmatprep.subr.bf16.mxu0 %v1372
        %1869 = vmatpush1.bf16.msra.mxu0 %v1371
        %1870 = vmatprep.subr.bf16.mxu0 %v1376
        %1871 = vmatpush1.bf16.msra.mxu0 %v1375
        %1872 = vmatprep.subr.bf16.mxu0 %v1380
        %1873 = vmatpush1.bf16.msra.mxu0 %v1379
        %1874 = vmatprep.subr.bf16.mxu0 %v1384
        %1875 = vmatpush1.bf16.msra.mxu0 %v1383
        %1876 = vmatprep.subr.bf16.mxu0 %v1388
        %1877 = vmatpush1.bf16.msra.mxu0 %v1387
        %1878 = vmatprep.subr.bf16.mxu0 %v1392
        %1879 = vmatpush1.bf16.msra.mxu0 %v1391
        %1880 = vmatprep.subr.bf16.mxu0 %v1396
        %1881 = vmatpush1.bf16.msra.mxu0 %v1395
        %1882 = vmatprep.subr.bf16.mxu0 %v1400
        %1883 = vmatpush1.bf16.msra.mxu0 %v1399
        %1884 = vmatprep.subr.bf16.mxu0 %v1404
        %1885 = vmatpush1.bf16.msra.mxu0 %v1403
        %1886 = vmatprep.subr.bf16.mxu0 %v1408
        %1887 = vmatpush1.bf16.msra.mxu0 %v1407
        %1888 = vmatprep.subr.bf16.mxu0 %v1412
        %1889 = vmatpush1.bf16.msra.mxu0 %v1411
        %1890 = vmatprep.subr.bf16.mxu0 %v1416
        %1891 = vmatpush1.bf16.msra.mxu0 %v1415
        %1892 = vmatprep.mubr.bf16.mxu0 %v766
        %1893 = vmatmul.mubr.bf16.gmra.mrb[0].mxu0 %v765
        %v1894 = vpop.f32.mrb[0].mxu0
        %v1895 = vadd.f32 %v750, %v1894
        %v1896 = vpop.f32.mrb[0].mxu0
        %v1897 = vadd.f32 %v752, %v1896
        %v1898 = vpop.f32.mrb[0].mxu0
        %v1899 = vpop.f32.mrb[0].mxu0
        %1900 = vdwg.mxu0
        %1901 = vmatprep.subr.bf16.mxu0 %v1420
        %1902 = vmatpush1.bf16.msra.mxu0 %v1419
        %1903 = vmatprep.subr.bf16.mxu0 %v1424
        %1904 = vmatpush1.bf16.msra.mxu0 %v1423
        %1905 = vmatprep.subr.bf16.mxu0 %v1428
        %1906 = vmatpush1.bf16.msra.mxu0 %v1427
        %1907 = vmatprep.subr.bf16.mxu0 %v1432
        %1908 = vmatpush1.bf16.msra.mxu0 %v1431
        %1909 = vmatprep.subr.bf16.mxu0 %v1436
        %1910 = vmatpush1.bf16.msra.mxu0 %v1435
        %1911 = vmatprep.subr.bf16.mxu0 %v1440
        %1912 = vmatpush1.bf16.msra.mxu0 %v1439
        %1913 = vmatprep.subr.bf16.mxu0 %v1444
        %1914 = vmatpush1.bf16.msra.mxu0 %v1443
        %1915 = vmatprep.subr.bf16.mxu0 %v1448
        %1916 = vmatpush1.bf16.msra.mxu0 %v1447
        %1917 = vmatprep.subr.bf16.mxu0 %v1452
        %1918 = vmatpush1.bf16.msra.mxu0 %v1451
        %1919 = vmatprep.subr.bf16.mxu0 %v1456
        %1920 = vmatpush1.bf16.msra.mxu0 %v1455
        %1921 = vmatprep.subr.bf16.mxu0 %v1460
        %1922 = vmatpush1.bf16.msra.mxu0 %v1459
        %1923 = vmatprep.subr.bf16.mxu0 %v1464
        %1924 = vmatpush1.bf16.msra.mxu0 %v1463
        %1925 = vmatprep.subr.bf16.mxu0 %v1468
        %1926 = vmatpush1.bf16.msra.mxu0 %v1467
        %1927 = vmatprep.subr.bf16.mxu0 %v1472
        %1928 = vmatpush1.bf16.msra.mxu0 %v1471
        %1929 = vmatprep.subr.bf16.mxu0 %v1476
        %1930 = vmatpush1.bf16.msra.mxu0 %v1475
        %1931 = vmatprep.subr.bf16.mxu0 %v1480
        %1932 = vmatpush1.bf16.msra.mxu0 %v1479
        %1933 = vmatprep.mubr.bf16.mxu0 %v768
        %1934 = vmatmul.mubr.bf16.gmra.mrb[0].mxu0 %v767
        %v1935 = vpop.f32.mrb[0].mxu0
        %v1936 = vadd.f32 %v1895, %v1935
        %v1937 = vpop.f32.mrb[0].mxu0
        %v1938 = vadd.f32 %v1897, %v1937
        %v1939 = vpop.f32.mrb[0].mxu0
        %v1940 = vpop.f32.mrb[0].mxu0
        %1941 = vdwg.mxu0
        %1942 = vmatprep.subr.bf16.mxu0 %v1484
        %1943 = vmatpush1.bf16.msra.mxu0 %v1483
        %1944 = vmatprep.subr.bf16.mxu0 %v1488
        %1945 = vmatpush1.bf16.msra.mxu0 %v1487
        %1946 = vmatprep.subr.bf16.mxu0 %v1492
        %1947 = vmatpush1.bf16.msra.mxu0 %v1491
        %1948 = vmatprep.subr.bf16.mxu0 %v1496
        %1949 = vmatpush1.bf16.msra.mxu0 %v1495
        %1950 = vmatprep.subr.bf16.mxu0 %v1500
        %1951 = vmatpush1.bf16.msra.mxu0 %v1499
        %1952 = vmatprep.subr.bf16.mxu0 %v1504
        %1953 = vmatpush1.bf16.msra.mxu0 %v1503
        %1954 = vmatprep.subr.bf16.mxu0 %v1508
        %1955 = vmatpush1.bf16.msra.mxu0 %v1507
        %1956 = vmatprep.subr.bf16.mxu0 %v1512
        %1957 = vmatpush1.bf16.msra.mxu0 %v1511
        %1958 = vmatprep.subr.bf16.mxu0 %v1516
        %1959 = vmatpush1.bf16.msra.mxu0 %v1515
        %1960 = vmatprep.subr.bf16.mxu0 %v1520
        %1961 = vmatpush1.bf16.msra.mxu0 %v1519
        %1962 = vmatprep.subr.bf16.mxu0 %v1524
        %1963 = vmatpush1.bf16.msra.mxu0 %v1523
        %1964 = vmatprep.subr.bf16.mxu0 %v1528
        %1965 = vmatpush1.bf16.msra.mxu0 %v1527
        %1966 = vmatprep.subr.bf16.mxu0 %v1532
        %1967 = vmatpush1.bf16.msra.mxu0 %v1531
        %1968 = vmatprep.subr.bf16.mxu0 %v1536
        %1969 = vmatpush1.bf16.msra.mxu0 %v1535
        %1970 = vmatprep.subr.bf16.mxu0 %v1540
        %1971 = vmatpush1.bf16.msra.mxu0 %v1539
        %1972 = vmatprep.subr.bf16.mxu0 %v1544
        %1973 = vmatpush1.bf16.msra.mxu0 %v1543
        %1974 = vmatprep.mubr.bf16.mxu0 %v770
        %1975 = vmatmul.mubr.bf16.gmra.mrb[0].mxu0 %v769
        %v1976 = vpop.f32.mrb[0].mxu0
        %v1977 = vadd.f32 %v1936, %v1976
        %v1978 = vpop.f32.mrb[0].mxu0
        %v1979 = vadd.f32 %v1938, %v1978
        %v1980 = vpop.f32.mrb[0].mxu0
        %v1981 = vpop.f32.mrb[0].mxu0
        %1982 = vdwg.mxu0
        %v1983 = vld [vmem:[%s3] sm:$0xf]
        %v1985 = vlaneseq
        %v1986 = vshrl.u32 %v1985, 7
        %v1987 = vsub.s32 0, %v1986
        %v1988 = vrot.slane %v1983, %v1987
        %v1989 = vlaneseq
        %v1990 = vshrl.u32 %v1989, 7
        %v1991 = vsub.s32 1, %v1990
        %v1992 = vrot.slane %v1983, %v1991
        %v1993 = vlaneseq
        %v1994 = vshrl.u32 %v1993, 7
        %v1995 = vsub.s32 2, %v1994
        %v1996 = vrot.slane %v1983, %v1995
        %v1997 = vlaneseq
        %v1998 = vshrl.u32 %v1997, 7
        %v1999 = vsub.s32 3, %v1998
        %v2000 = vrot.slane %v1983, %v1999
        %v2005 = vadd.f32 %v1854, %v1988
        %v2006 = vadd.f32 %v1856, %v1992
        %v2007 = vadd.f32 %v1977, %v1996
        %v2008 = vadd.f32 %v1979, %v2000
        %v2009 = vxor.u32 %v2005, 2147483648
        %v2010 = vmul.f32 %v2009, 1.442695
        %v2011 = vpow.pop %v2010
        %v2012 = vadd.f32 %v2011, 1.0
        %v2013 = vrcp.pop %v2012
        %v2014 = vmul.f32 1.0, %v2013
        %v2015 = vxor.u32 %v2006, 2147483648
        %v2016 = vmul.f32 %v2015, 1.442695
        %v2017 = vpow.pop %v2016
        %v2018 = vadd.f32 %v2017, 1.0
        %v2019 = vrcp.pop %v2018
        %v2020 = vmul.f32 1.0, %v2019
        %v2021 = vtanh.pop %v2007
        %v2022 = vxor.u32 %v2008, 2147483648
        %v2023 = vmul.f32 %v2022, 1.442695
        %v2024 = vpow.pop %v2023
        %v2025 = vadd.f32 %v2024, 1.0
        %v2026 = vrcp.pop %v2025
        %v2027 = vmul.f32 1.0, %v2026
        %v2028 = vld [vmem:[#allocation3] sm:$0xff]
        %v2029 = vmul.f32 %v2020, %v2028
        %v2030 = vmul.f32 %v2014, %v2021
        %v2031 = vadd.f32 %v2029, %v2030
        %v2032 = vtanh.pop %v2031
        %v2033 = vmul.f32 %v2027, %v2032
        %2034 = vst [vmem:[#allocation3] sm:$0xff] %v2031
        %2035 = vst [vmem:[#allocation2] sm:$0xff] %v2033
        %v2036 = vpack.c.bf16 %v2033, %v2033
        %v2037 = vld [vmem:[%s4] sm:$0xf]
        %v2038 = vld [vmem:[%s4 + $0x4] sm:$0xf]
        %v2039 = vld [vmem:[%s4 + $0x8] sm:$0xf]
        %v2040 = vld [vmem:[%s4 + $0xc] sm:$0xf]
        %v2041 = vld [vmem:[%s4 + $0x10] sm:$0xf]
        %v2042 = vld [vmem:[%s4 + $0x14] sm:$0xf]
        %v2043 = vld [vmem:[%s4 + $0x18] sm:$0xf]
        %v2044 = vld [vmem:[%s4 + $0x1c] sm:$0xf]
        %v2045 = vld [vmem:[%s4 + $0x20] sm:$0xf]
        %v2046 = vld [vmem:[%s4 + $0x24] sm:$0xf]
        %v2047 = vld [vmem:[%s4 + $0x28] sm:$0xf]
        %v2048 = vld [vmem:[%s4 + $0x2c] sm:$0xf]
        %v2049 = vld [vmem:[%s4 + $0x30] sm:$0xf]
        %v2050 = vld [vmem:[%s4 + $0x34] sm:$0xf]
        %v2051 = vld [vmem:[%s4 + $0x38] sm:$0xf]
        %v2052 = vld [vmem:[%s4 + $0x3c] sm:$0xf]
        %v2053 = vld [vmem:[%s5] sm:$0x1]
        %v2055 = vlaneseq
        %v2056 = vshrl.u32 %v2055, 7
        %v2057 = vsub.s32 0, %v2056
        %v2058 = vrot.slane %v2053, %v2057
        %v2076 = vunpack.c.l.b16 %v2037
        %v2077 = vunpack.c.l.b16 %v2038
        %v2078 = vunpack.c.l.b16 %v2039
        %v2079 = vunpack.c.l.b16 %v2040
        %v2080 = vunpack.c.l.b16 %v2041
        %v2081 = vunpack.c.l.b16 %v2042
        %v2082 = vunpack.c.l.b16 %v2043
        %v2083 = vunpack.c.l.b16 %v2044
        %v2084 = vunpack.c.l.b16 %v2045
        %v2085 = vunpack.c.l.b16 %v2046
        %v2086 = vunpack.c.l.b16 %v2047
        %v2087 = vunpack.c.l.b16 %v2048
        %v2088 = vunpack.c.l.b16 %v2049
        %v2089 = vunpack.c.l.b16 %v2050
        %v2090 = vunpack.c.l.b16 %v2051
        %v2091 = vunpack.c.l.b16 %v2052
        %v2092 = vpack.c.b16 %v2077, %v2076
        %v2093 = vpack.c.b16 %v2079, %v2078
        %v2094 = vpack.c.b16 %v2081, %v2080
        %v2095 = vpack.c.b16 %v2083, %v2082
        %v2096 = vpack.c.b16 %v2085, %v2084
        %v2097 = vpack.c.b16 %v2087, %v2086
        %v2098 = vpack.c.b16 %v2089, %v2088
        %v2099 = vpack.c.b16 %v2091, %v2090
        %2108 = vmatprep.subr.bf16.mxu0 0
        %2109 = vmatpush1.bf16.msra.mxu0 %v2092
        %2110 = vmatprep.subr.bf16.mxu0 0
        %2111 = vmatpush1.bf16.msra.mxu0 %v2093
        %2112 = vmatprep.subr.bf16.mxu0 0
        %2113 = vmatpush1.bf16.msra.mxu0 %v2094
        %2114 = vmatprep.subr.bf16.mxu0 0
        %2115 = vmatpush1.bf16.msra.mxu0 %v2095
        %2116 = vmatprep.subr.bf16.mxu0 0
        %2117 = vmatpush1.bf16.msra.mxu0 %v2096
        %2118 = vmatprep.subr.bf16.mxu0 0
        %2119 = vmatpush1.bf16.msra.mxu0 %v2097
        %2120 = vmatprep.subr.bf16.mxu0 0
        %2121 = vmatpush1.bf16.msra.mxu0 %v2098
        %2122 = vmatprep.subr.bf16.mxu0 0
        %2123 = vmatpush1.bf16.msra.mxu0 %v2099
        %2124 = vmatprep.subr.bf16.mxu0 0
        %2125 = vmatpush1.bf16.msra.mxu0 0
        %2126 = vmatprep.subr.bf16.mxu0 0
        %2127 = vmatpush1.bf16.msra.mxu0 0
        %2128 = vmatprep.subr.bf16.mxu0 0
        %2129 = vmatpush1.bf16.msra.mxu0 0
        %2130 = vmatprep.subr.bf16.mxu0 0
        %2131 = vmatpush1.bf16.msra.mxu0 0
        %2132 = vmatprep.subr.bf16.mxu0 0
        %2133 = vmatpush1.bf16.msra.mxu0 0
        %2134 = vmatprep.subr.bf16.mxu0 0
        %2135 = vmatpush1.bf16.msra.mxu0 0
        %2136 = vmatprep.subr.bf16.mxu0 0
        %2137 = vmatpush1.bf16.msra.mxu0 0
        %2138 = vmatprep.subr.bf16.mxu0 0
        %2139 = vmatpush1.bf16.msra.mxu0 0
        %2140 = vmatprep.mubr.bf16.mxu0 0
        %2141 = vmatmul.mubr.bf16.gmra.mrb[0].mxu0 %v2036
        %v2142 = vpop.f32.mrb[0].mxu0
        %v2143 = vadd.f32 %v2058, %v2142
        %v2144 = vpop.f32.mrb[0].mxu0
        %v2145 = vpop.f32.mrb[0].mxu0
        %v2146 = vpop.f32.mrb[0].mxu0
        %2147 = vdwg.mxu0
        %2148 = vst [vmem:[%s268] sm:$0xff] %v2143
        %s2149 = sand.u32 %s175, 1
        %s2150 = scalar_lea.sflag [#allocation5], %s2149
        %s2151 = sand.u32 %s175, 1
        %s2152 = smul.addr %s2151, 8
        %s2153 = scalar_lea.vmem [#allocation4], %s2152
        // Predicated region
        $region49: #{lstm_forward.1} parent=43 // pred_check
          %p2154 = pneg %p185
        $region50: #{lstm_forward.1} parent=43 // pred_check_branch
          %2156 = sbr.rel (%p2154) target = $region52
        $region51: #{lstm_forward.1} parent=43 // pred_region
          %s2158 = ssub.s32 128, 128
          %2159 = vsyncadd %s2150, %s2158
          %s2160 = sadd.s32 %s24, %s25
          %s2161 = smul.addr %s2160, 128
          %s2162 = scalar_lea.hbm %s6, %s2161
          %s2164 = sshll.u32 %s2153, 4
          %s2165 = int_to_ptr.vmem [resolvable:$true] %s2164
          %2167 = dma.vmem_to_hbm [thread:$0]  %s2165, 128, %s2162, %s2150
        $region52: #{lstm_forward.1} parent=43 // pred_fallthru
          _
      $region44: #{lstm_forward.1} parent=5 // pred_fallthru
        _
      %p2168 = scmp.le.s32.totalorder 2, %s15
      // Predicated region
      $region53: #{lstm_forward.1} parent=5 // pred_check
        %p2169 = pneg %p2168
      $region54: #{lstm_forward.1} parent=5 // pred_check_branch
        %2171 = sbr.rel (%p2169) target = $region56
      $region55: #{lstm_forward.1} parent=5 // pred_region
        %s2172 = ssub.s32 %s15, 2
        // Predicated region
        $region57: #{lstm_forward.1} parent=55 // pred_check
          %p2173 = pneg %p191
        $region58: #{lstm_forward.1} parent=55 // pred_check_branch
          %2175 = sbr.rel (%p2173) target = $region60
        $region59: #{lstm_forward.1} parent=55 // pred_region
          %s2176 = sand.u32 %s176, 1
          %s2177 = scalar_lea.sflag [#allocation5], %s2176
          %s2178 = sand.u32 %s176, 1
          %s2179 = smul.addr %s2178, 8
          %s2180 = scalar_lea.vmem [#allocation4], %s2179
          %2181 = dma.done %s2177, 128
        $region60: #{lstm_forward.1} parent=55 // pred_fallthru
          _
      $region56: #{lstm_forward.1} parent=5 // pred_fallthru
        _
    $region6: #{lstm_forward.1} parent=1 // loop_footer
      %s19 = sadd.s32 1, %s15
    $region7: #{lstm_forward.1} parent=1 // loop_footer_branch
      %14 = sbr.rel target = $region3
    $region8: #{lstm_forward.1} parent=1 // loop_exit
      _
    %2182 = vsyncpa [#allocation5], 1
    %s2183 = scalar_lea.sflag [#allocation5], 1
    %2184 = vsyncpa %s2183, 1

</llo_original>
